<compile_context>
chip_gen: v7x
topology: tpu7x:2x2x1
jax: 0.10.0
libtpu: 0.0.40
codegen_flags: <defaults>
</compile_context>

<pallas_src>
import functools
import math

import jax
import jax.numpy as jnp
from jax import lax
from jax.experimental import pallas as pl
from jax.experimental.pallas import tpu as pltpu

HIDDEN = 50           # nn.Linear(state_size, 50), nn.Linear(50, 50)
LANE = 128            # TPU lane width
SUBLANE = 8           # sublane granularity for the batch tile
SINGLE_TILE_MAX = 512 # batches up to this run as a single grid step
MAX_TB = 2048         # cap on rows per tile for very large batches


def _round_up(x, m):
    return ((x + m - 1) // m) * m


def _choose_tiles(batch):
    """Return (tile_rows, padded_batch). Static per x.shape (resolved at trace time)."""
    b8 = _round_up(batch, SUBLANE)
    if b8 <= SINGLE_TILE_MAX:
        # One grid step: minimal per-step overhead on serial v5e/v6e.
        return b8, b8
    # Large batch: even (>=2) number of balanced tiles so both v7x TensorCores get work.
    n_tiles = max(2, -(-b8 // MAX_TB))
    if n_tiles % 2:
        n_tiles += 1
    tb = _round_up(-(-b8 // n_tiles), SUBLANE)
    return tb, tb * n_tiles


def _qnetwork_kernel(x_ref, w1_ref, b1_ref, w2_ref, b2_ref, w3_ref, b3_ref, o_ref):
    dot = functools.partial(
        jnp.dot,
        preferred_element_type=jnp.float32,
        precision=lax.Precision.HIGHEST,
    )
    h1 = jnp.maximum(dot(x_ref[...], w1_ref[...]) + b1_ref[...], 0.0)
    h2 = jnp.maximum(dot(h1, w2_ref[...]) + b2_ref[...], 0.0)
    o_ref[...] = (dot(h2, w3_ref[...]) + b3_ref[...]).astype(o_ref.dtype)
    # TODO(synk): PyTorch's host-side NaN check (math.isnan(x[0][0].item()) -> set_trace())
    # is a debugger hook with no kernel equivalent; omitted.


def prepare_params(params):
    """One-time lane padding of the hidden dim + f32 cast (hoisted out of the forward)."""
    h_pad = _round_up(HIDDEN, LANE)
    f32 = jnp.float32
    return {
        "w1": jnp.pad(params["w1"].astype(f32), ((0, 0), (0, h_pad - HIDDEN))),
        "b1": jnp.pad(params["b1"].astype(f32), ((0, 0), (0, h_pad - HIDDEN))),
        "w2": jnp.pad(params["w2"].astype(f32), ((0, h_pad - HIDDEN), (0, h_pad - HIDDEN))),
        "b2": jnp.pad(params["b2"].astype(f32), ((0, 0), (0, h_pad - HIDDEN))),
        "w3": jnp.pad(params["w3"].astype(f32), ((0, h_pad - HIDDEN), (0, 0))),
        "b3": params["b3"].astype(f32),
    }


@jax.jit
def qnetwork_forward(x, prepared):
    """QNetwork forward pass via a single batch-tiled Pallas call.

    x: (batch, state_size) float32
    prepared: output of prepare_params(); weights stored as (in, out) so the kernel
              computes x @ W + b (== PyTorch x @ W.T + b).
    returns: (batch, action_size) float32
    """
    batch, state_size = x.shape
    h_pad = prepared["w1"].shape[1]
    action_size = prepared["w3"].shape[1]

    tb, b_pad = _choose_tiles(batch)
    xp = x.astype(jnp.float32)
    if b_pad != batch:
        # Row padding only (no feature-dim padding). Padded rows are dropped below.
        xp = jnp.pad(xp, ((0, b_pad - batch), (0, 0)))

    grid = (b_pad // tb,)

    def resident(shape):
        # Same block every grid step -> weights/biases stay resident in VMEM.
        return pl.BlockSpec(shape, lambda i: (0,) * len(shape), memory_space=pltpu.VMEM)

    out_padded = pl.pallas_call(
        _qnetwork_kernel,
        out_shape=jax.ShapeDtypeStruct((b_pad, action_size), jnp.float32),
        grid=grid,
        in_specs=[
            pl.BlockSpec((tb, state_size), lambda i: (i, 0), memory_space=pltpu.VMEM),  # x tile
            resident((state_size, h_pad)),   # w1
            resident((1, h_pad)),            # b1
            resident((h_pad, h_pad)),        # w2
            resident((1, h_pad)),            # b2
            resident((h_pad, action_size)),  # w3
            resident((1, action_size)),      # b3
        ],
        out_specs=pl.BlockSpec((tb, action_size), lambda i: (i, 0), memory_space=pltpu.VMEM),
        compiler_params=pltpu.CompilerParams(
            dimension_semantics=("parallel",),  # batch tiles shard across v7x's 2 TCs
        ),
    )(xp, prepared["w1"], prepared["b1"], prepared["w2"], prepared["b2"],
      prepared["w3"], prepared["b3"])

    return out_padded[:batch]


def init_params(key, state_size, action_size):
    """Deterministic init mimicking PyTorch nn.Linear default (U(-1/sqrt(fan_in), +))."""
    def linear_init(k, fan_in, fan_out):
        kw, kb = jax.random.split(k)
        bound = 1.0 / math.sqrt(fan_in)
        w = jax.random.uniform(kw, (fan_in, fan_out), jnp.float32, -bound, bound)
        b = jax.random.uniform(kb, (1, fan_out), jnp.float32, -bound, bound)
        return w, b

    k1, k2, k3 = jax.random.split(key, 3)
    w1, b1 = linear_init(k1, state_size, HIDDEN)
    w2, b2 = linear_init(k2, HIDDEN, HIDDEN)
    w3, b3 = linear_init(k3, HIDDEN, action_size)
    return {"w1": w1, "b1": b1, "w2": w2, "b2": b2, "w3": w3, "b3": b3}


def reference_forward(x, p):
    dot = functools.partial(jnp.dot, precision=lax.Precision.HIGHEST)
    h1 = jnp.maximum(dot(x, p["w1"]) + p["b1"], 0.0)
    h2 = jnp.maximum(dot(h1, p["w2"]) + p["b2"], 0.0)
    return dot(h2, p["w3"]) + p["b3"]


if __name__ == "__main__":
    state_size = 16
    action_size = 4
    batch = 8

    key = jax.random.PRNGKey(0)
    kx, kp = jax.random.split(key)
    x = jax.random.normal(kx, (batch, state_size), dtype=jnp.float32)
    params = init_params(kp, state_size, action_size)
    prepared = prepare_params(params)   # one-time padding, outside the per-call path

    # Small inference-sized batch (single grid step).
    out = jax.block_until_ready(qnetwork_forward(x, prepared))
    ref = reference_forward(x, params)
    assert out.shape == (batch, action_size)
    assert jnp.allclose(out, ref, atol=1e-5, rtol=1e-5), "small-batch mismatch vs JAX reference"

    # Replay-buffer-sized batch (exercises the multi-tile, row-padded grid path).
    xb = jax.random.normal(kx, (1000, state_size), dtype=jnp.float32)
    outb = jax.block_until_ready(qnetwork_forward(xb, prepared))
    refb = reference_forward(xb, params)
    assert outb.shape == (1000, action_size)
    assert jnp.allclose(outb, refb, atol=1e-4, rtol=1e-4), "large-batch mismatch vs JAX reference"

    print("KERNEL_OK")
</pallas_src>

<mosaic_0001>
module attributes {stable_mosaic.version = 11 : i64} {
  func.func @_qnetwork_kernel(%arg0: i32, %arg1: memref<8x16xf32, #tpu.memory_space<vmem>>, %arg2: memref<16x128xf32, #tpu.memory_space<vmem>>, %arg3: memref<1x128xf32, #tpu.memory_space<vmem>>, %arg4: memref<128x128xf32, #tpu.memory_space<vmem>>, %arg5: memref<1x128xf32, #tpu.memory_space<vmem>>, %arg6: memref<128x4xf32, #tpu.memory_space<vmem>>, %arg7: memref<1x4xf32, #tpu.memory_space<vmem>>, %arg8: memref<8x4xf32, #tpu.memory_space<vmem>>) attributes {dimension_semantics = [#tpu.dimension_semantics<parallel>], iteration_bounds = array<i64: 1>, scalar_prefetch = 0 : i64, scratch_operands = 0 : i64, tpu.core_type = #tpu.core_type<tc>, window_params = [{transform_indices = @transform_0, window_bounds = array<i64: 8, 16>}, {pipeline_mode = #tpu.pipeline_mode<synchronous>, transform_indices = @transform_1, window_bounds = array<i64: 16, 128>}, {pipeline_mode = #tpu.pipeline_mode<synchronous>, transform_indices = @transform_2, window_bounds = array<i64: 1, 128>}, {pipeline_mode = #tpu.pipeline_mode<synchronous>, transform_indices = @transform_3, window_bounds = array<i64: 128, 128>}, {pipeline_mode = #tpu.pipeline_mode<synchronous>, transform_indices = @transform_4, window_bounds = array<i64: 1, 128>}, {pipeline_mode = #tpu.pipeline_mode<synchronous>, transform_indices = @transform_5, window_bounds = array<i64: 128, 4>}, {pipeline_mode = #tpu.pipeline_mode<synchronous>, transform_indices = @transform_6, window_bounds = array<i64: 1, 4>}, {transform_indices = @transform_7, window_bounds = array<i64: 8, 4>}]} {
    %c0 = arith.constant 0 : index
    %c0_0 = arith.constant 0 : index
    %0 = vector.load %arg1[%c0, %c0_0] : memref<8x16xf32, #tpu.memory_space<vmem>>, vector<8x16xf32>
    %c0_1 = arith.constant 0 : index
    %c0_2 = arith.constant 0 : index
    %1 = vector.load %arg2[%c0_1, %c0_2] : memref<16x128xf32, #tpu.memory_space<vmem>>, vector<16x128xf32>
    %cst = arith.constant dense<0.000000e+00> : vector<8x128xf32>
    %2 = tpu.matmul %0, %1, %cst {dimension_numbers = #tpu.dot_dimension_numbers<[1], [0], [0], [1], [0, 0, 1, 1], [], []>, precision = #tpu.contract_precision<fp32>} : vector<8x16xf32>, vector<16x128xf32>, vector<8x128xf32> -> vector<8x128xf32>
    %c0_3 = arith.constant 0 : index
    %c0_4 = arith.constant 0 : index
    %3 = vector.load %arg3[%c0_3, %c0_4] : memref<1x128xf32, #tpu.memory_space<vmem>>, vector<1x128xf32>
    %4 = vector.broadcast %3 : vector<1x128xf32> to vector<8x128xf32>
    %5 = arith.addf %2, %4 : vector<8x128xf32>
    %cst_5 = arith.constant 0.000000e+00 : f32
    %6 = vector.broadcast %cst_5 : f32 to vector<8x128xf32>
    %7 = arith.maximumf %5, %6 : vector<8x128xf32>
    %c0_6 = arith.constant 0 : index
    %c0_7 = arith.constant 0 : index
    %8 = vector.load %arg4[%c0_6, %c0_7] : memref<128x128xf32, #tpu.memory_space<vmem>>, vector<128x128xf32>
    %cst_8 = arith.constant dense<0.000000e+00> : vector<8x128xf32>
    %9 = tpu.matmul %7, %8, %cst_8 {dimension_numbers = #tpu.dot_dimension_numbers<[1], [0], [0], [1], [0, 0, 1, 1], [], []>, precision = #tpu.contract_precision<fp32>} : vector<8x128xf32>, vector<128x128xf32>, vector<8x128xf32> -> vector<8x128xf32>
    %c0_9 = arith.constant 0 : index
    %c0_10 = arith.constant 0 : index
    %10 = vector.load %arg5[%c0_9, %c0_10] : memref<1x128xf32, #tpu.memory_space<vmem>>, vector<1x128xf32>
    %11 = vector.broadcast %10 : vector<1x128xf32> to vector<8x128xf32>
    %12 = arith.addf %9, %11 : vector<8x128xf32>
    %cst_11 = arith.constant 0.000000e+00 : f32
    %13 = vector.broadcast %cst_11 : f32 to vector<8x128xf32>
    %14 = arith.maximumf %12, %13 : vector<8x128xf32>
    %c0_12 = arith.constant 0 : index
    %c0_13 = arith.constant 0 : index
    %15 = vector.load %arg6[%c0_12, %c0_13] : memref<128x4xf32, #tpu.memory_space<vmem>>, vector<128x4xf32>
    %cst_14 = arith.constant dense<0.000000e+00> : vector<8x4xf32>
    %16 = tpu.matmul %14, %15, %cst_14 {dimension_numbers = #tpu.dot_dimension_numbers<[1], [0], [0], [1], [0, 0, 1, 1], [], []>, precision = #tpu.contract_precision<fp32>} : vector<8x128xf32>, vector<128x4xf32>, vector<8x4xf32> -> vector<8x4xf32>
    %c0_15 = arith.constant 0 : index
    %c0_16 = arith.constant 0 : index
    %17 = vector.load %arg7[%c0_15, %c0_16] : memref<1x4xf32, #tpu.memory_space<vmem>>, vector<1x4xf32>
    %18 = vector.broadcast %17 : vector<1x4xf32> to vector<8x4xf32>
    %19 = arith.addf %16, %18 : vector<8x4xf32>
    %c0_17 = arith.constant 0 : index
    %c0_18 = arith.constant 0 : index
    %20 = vector.load %arg8[%c0_17, %c0_18] : memref<8x4xf32, #tpu.memory_space<vmem>>, vector<8x4xf32>
    tpu.vector_store %arg8[%c0_17, %c0_18], %19 {strides = array<i32>} : memref<8x4xf32, #tpu.memory_space<vmem>>, vector<8x4xf32>,
    return
  }
  func.func @transform_0(%arg0: i32) -> (i32, i32) {
    %c0_i32 = arith.constant 0 : i32
    %c0_i32_0 = arith.constant 0 : i32
    return %arg0, %c0_i32 : i32, i32
  }
  func.func @transform_1(%arg0: i32) -> (i32, i32) {
    %c0_i32 = arith.constant 0 : i32
    %c0_i32_0 = arith.constant 0 : i32
    %c0_i32_1 = arith.constant 0 : i32
    return %c0_i32, %c0_i32_0 : i32, i32
  }
  func.func @transform_2(%arg0: i32) -> (i32, i32) {
    %c0_i32 = arith.constant 0 : i32
    %c0_i32_0 = arith.constant 0 : i32
    %c0_i32_1 = arith.constant 0 : i32
    return %c0_i32, %c0_i32_0 : i32, i32
  }
  func.func @transform_3(%arg0: i32) -> (i32, i32) {
    %c0_i32 = arith.constant 0 : i32
    %c0_i32_0 = arith.constant 0 : i32
    %c0_i32_1 = arith.constant 0 : i32
    return %c0_i32, %c0_i32_0 : i32, i32
  }
  func.func @transform_4(%arg0: i32) -> (i32, i32) {
    %c0_i32 = arith.constant 0 : i32
    %c0_i32_0 = arith.constant 0 : i32
    %c0_i32_1 = arith.constant 0 : i32
    return %c0_i32, %c0_i32_0 : i32, i32
  }
  func.func @transform_5(%arg0: i32) -> (i32, i32) {
    %c0_i32 = arith.constant 0 : i32
    %c0_i32_0 = arith.constant 0 : i32
    %c0_i32_1 = arith.constant 0 : i32
    return %c0_i32, %c0_i32_0 : i32, i32
  }
  func.func @transform_6(%arg0: i32) -> (i32, i32) {
    %c0_i32 = arith.constant 0 : i32
    %c0_i32_0 = arith.constant 0 : i32
    %c0_i32_1 = arith.constant 0 : i32
    return %c0_i32, %c0_i32_0 : i32, i32
  }
  func.func @transform_7(%arg0: i32) -> (i32, i32) {
    %c0_i32 = arith.constant 0 : i32
    %c0_i32_0 = arith.constant 0 : i32
    return %arg0, %c0_i32 : i32, i32
  }
}

</mosaic_0001>

<llo_original>
// kernel: qnetwork_forward.1
$region0: #{qnetwork_forward.1}
  #allocation0 [shape = 'u32[]', space=smem, size = 0x4, offset = 0x4, fixed_abs, tag = 'smem constant byte address 0x4 - core index']
  #allocation1 [shape = 'u32[144,128]{1,0:T(1,128)}', space=vmem, size = 0x12000, scoped, tag = 'internal scratch']
  %s0 = inlined_call_operand.hbm [shape: f32[8,16], index: 0, kind: input, shape index: {}]
  %s1 = inlined_call_operand.vmem [shape: f32[16,128], index: 1, kind: input, shape index: {}]
  %s2 = inlined_call_operand.vmem [shape: f32[1,128], index: 2, kind: input, shape index: {}]
  %s3 = inlined_call_operand.vmem [shape: f32[128,128], index: 3, kind: input, shape index: {}]
  %s4 = inlined_call_operand.vmem [shape: f32[1,128], index: 4, kind: input, shape index: {}]
  %s5 = inlined_call_operand.vmem [shape: f32[128,4], index: 5, kind: input, shape index: {}]
  %s6 = inlined_call_operand.vmem [shape: f32[1,4], index: 6, kind: input, shape index: {}]
  %s7 = inlined_call_operand.vmem [shape: f32[8,4], index: 7, kind: output, shape index: {}]
  %s8 = sld [smem:[#allocation0]]
  $region42: #{qnetwork_forward.1} parent=0
    _
  %s10 = ssub.s32 1, %s8
  %s11 = scalar_select 0, %s10, %s8
  $region1: #{qnetwork_forward.1} parent=0
    #allocation2 [shape = 'u8[4096]{0}', space=vmem, size = 0x1000, scoped, tag = 'input window, operand 0, single buffered']
    #allocation3 [shape = 's32[1]{0}', space=sflag, size = 0x4, scoped, tag = 'scoped memory for qnetwork_forward.1']
    %12 = vsyncpa [#allocation3], 0
    // Predicated region
    $region2: #{qnetwork_forward.1} parent=1 // pred_check
      _
    $region3: #{qnetwork_forward.1} parent=1 // pred_check_branch
      %14 = sbr.rel (0) target = $region5
    $region4: #{qnetwork_forward.1} parent=1 // pred_region
      %s16 = ssub.s32 128, 128
      %17 = vsyncadd [#allocation3], %s16
      %s19 = sshll.u32 [#allocation2], 4
      %s20 = int_to_ptr.vmem [resolvable:$true] %s19
      %22 = dma.hbm_to_vmem [thread:$0]  %s0, 128, %s20, [#allocation3]
    $region5: #{qnetwork_forward.1} parent=1 // pred_fallthru
      _
    // Predicated region
    $region6: #{qnetwork_forward.1} parent=1 // pred_check
      _
    $region7: #{qnetwork_forward.1} parent=1 // pred_check_branch
      %24 = sbr.rel (0) target = $region9
    $region8: #{qnetwork_forward.1} parent=1 // pred_region
      _
    $region9: #{qnetwork_forward.1} parent=1 // pred_fallthru
      _
    // Predicated region
    $region10: #{qnetwork_forward.1} parent=1 // pred_check
      _
    $region11: #{qnetwork_forward.1} parent=1 // pred_check_branch
      %26 = sbr.rel (0) target = $region13
    $region12: #{qnetwork_forward.1} parent=1 // pred_region
      _
    $region13: #{qnetwork_forward.1} parent=1 // pred_fallthru
      _
    // Predicated region
    $region14: #{qnetwork_forward.1} parent=1 // pred_check
      _
    $region15: #{qnetwork_forward.1} parent=1 // pred_check_branch
      %28 = sbr.rel (0) target = $region17
    $region16: #{qnetwork_forward.1} parent=1 // pred_region
      _
    $region17: #{qnetwork_forward.1} parent=1 // pred_fallthru
      _
    // Predicated region
    $region18: #{qnetwork_forward.1} parent=1 // pred_check
      _
    $region19: #{qnetwork_forward.1} parent=1 // pred_check_branch
      %30 = sbr.rel (0) target = $region21
    $region20: #{qnetwork_forward.1} parent=1 // pred_region
      _
    $region21: #{qnetwork_forward.1} parent=1 // pred_fallthru
      _
    // Predicated region
    $region22: #{qnetwork_forward.1} parent=1 // pred_check
      _
    $region23: #{qnetwork_forward.1} parent=1 // pred_check_branch
      %32 = sbr.rel (0) target = $region25
    $region24: #{qnetwork_forward.1} parent=1 // pred_region
      _
    $region25: #{qnetwork_forward.1} parent=1 // pred_fallthru
      _
    // Predicated region
    $region26: #{qnetwork_forward.1} parent=1 // pred_check
      _
    $region27: #{qnetwork_forward.1} parent=1 // pred_check_branch
      %34 = sbr.rel (0) target = $region29
    $region28: #{qnetwork_forward.1} parent=1 // pred_region
      _
    $region29: #{qnetwork_forward.1} parent=1 // pred_fallthru
      _
    // Predicated region
    $region30: #{qnetwork_forward.1} parent=1 // pred_check
      _
    $region31: #{qnetwork_forward.1} parent=1 // pred_check_branch
      %36 = sbr.rel (0) target = $region33
    $region32: #{qnetwork_forward.1} parent=1 // pred_region
      %37 = dma.done [#allocation3], 128
    $region33: #{qnetwork_forward.1} parent=1 // pred_fallthru
      _
    %v38 = vld [vmem:[#allocation2] sm:$0xff]
    %v39 = vld [vmem:[%s1] sm:$0xff]
    %v40 = vld [vmem:[%s1 + $0x8] sm:$0xff]
    %v41 = vld [vmem:[%s2] sm:$0x1]
    %v43 = vlaneseq
    %v44 = vshrl.u32 %v43, 7
    %v45 = vsub.s32 0, %v44
    %v46 = vrot.slane %v41, %v45
    %vm48 = vcmask 130048
    %v50 = vsel %vm48, %v38, 0
    %52 = vmatprep.subr.mxu0 0.0
    %v53 = vand.u32 %v39, 4294901760
    %54 = vmatpush1.msra.mxu0 %v53
    %55 = vmatprep.subr.mxu0 0.0
    %v56 = vand.u32 %v40, 4294901760
    %57 = vmatpush1.msra.mxu0 %v56
    %58 = vmatprep.subr.mxu0 0.0
    %59 = vmatpush1.msra.mxu0 0.0
    %60 = vmatprep.subr.mxu0 0.0
    %61 = vmatpush1.msra.mxu0 0.0
    %62 = vmatprep.subr.mxu0 0.0
    %63 = vmatpush1.msra.mxu0 0.0
    %64 = vmatprep.subr.mxu0 0.0
    %65 = vmatpush1.msra.mxu0 0.0
    %66 = vmatprep.subr.mxu0 0.0
    %67 = vmatpush1.msra.mxu0 0.0
    %68 = vmatprep.subr.mxu0 0.0
    %69 = vmatpush1.msra.mxu0 0.0
    %70 = vmatprep.subr.mxu0 0.0
    %71 = vmatpush1.msra.mxu0 0.0
    %72 = vmatprep.subr.mxu0 0.0
    %73 = vmatpush1.msra.mxu0 0.0
    %74 = vmatprep.subr.mxu0 0.0
    %75 = vmatpush1.msra.mxu0 0.0
    %76 = vmatprep.subr.mxu0 0.0
    %77 = vmatpush1.msra.mxu0 0.0
    %78 = vmatprep.subr.mxu0 0.0
    %79 = vmatpush1.msra.mxu0 0.0
    %80 = vmatprep.subr.mxu0 0.0
    %81 = vmatpush1.msra.mxu0 0.0
    %82 = vmatprep.subr.mxu0 0.0
    %83 = vmatpush1.msra.mxu0 0.0
    %84 = vmatprep.subr.mxu0 0.0
    %85 = vmatpush1.msra.mxu0 0.0
    %86 = vmatprep.subr.mxu0 0.0
    %87 = vmatpush1.msra.mxu0 0.0
    %88 = vmatprep.subr.mxu0 0.0
    %89 = vmatpush1.msra.mxu0 0.0
    %90 = vmatprep.subr.mxu0 0.0
    %91 = vmatpush1.msra.mxu0 0.0
    %92 = vmatprep.subr.mxu0 0.0
    %93 = vmatpush1.msra.mxu0 0.0
    %94 = vmatprep.subr.mxu0 0.0
    %95 = vmatpush1.msra.mxu0 0.0
    %96 = vmatprep.subr.mxu0 0.0
    %97 = vmatpush1.msra.mxu0 0.0
    %98 = vmatprep.subr.mxu0 0.0
    %99 = vmatpush1.msra.mxu0 0.0
    %100 = vmatprep.subr.mxu0 0.0
    %101 = vmatpush1.msra.mxu0 0.0
    %102 = vmatprep.subr.mxu0 0.0
    %103 = vmatpush1.msra.mxu0 0.0
    %104 = vmatprep.subr.mxu0 0.0
    %105 = vmatpush1.msra.mxu0 0.0
    %106 = vmatprep.subr.mxu0 0.0
    %107 = vmatpush1.msra.mxu0 0.0
    %108 = vmatprep.subr.mxu0 0.0
    %109 = vmatpush1.msra.mxu0 0.0
    %110 = vmatprep.subr.mxu0 0.0
    %111 = vmatpush1.msra.mxu0 0.0
    %112 = vmatprep.subr.mxu0 0.0
    %113 = vmatpush1.msra.mxu0 0.0
    %114 = vmatprep.subr.mxu0 0.0
    %115 = vmatpush1.msra.mxu0 0.0
    %116 = vmatprep.subr.mxu0 0.0
    %117 = vmatpush1.msra.mxu0 0.0
    %118 = vmatprep.mubr.f32.mxu0 0.0
    %v119 = vand.u32 %v50, 4294901760
    %v120 = vsub.f32 %v50, %v119
    %v121 = vand.u32 %v120, 4294901760
    %v122 = vsub.f32 %v120, %v121
    %v123 = vand.u32 %v122, 4294901760
    %124 = vmatmul.mubr.f32.gmra.mrb[0].mxu0 %v123
    %v125 = vpop.f32.mrb[0].mxu0
    %v126 = vadd.f32 %v46, %v125
    %v127 = vpop.f32.mrb[0].mxu0
    %128 = vdwg.mxu0
    %129 = vmatprep.subr.mxu0 0.0
    %v130 = vand.u32 %v39, 4294901760
    %v131 = vsub.f32 %v39, %v130
    %v132 = vand.u32 %v131, 4294901760
    %v133 = vsub.f32 %v131, %v132
    %v134 = vand.u32 %v133, 4294901760
    %135 = vmatpush1.msra.mxu0 %v134
    %136 = vmatprep.subr.mxu0 0.0
    %v137 = vand.u32 %v40, 4294901760
    %v138 = vsub.f32 %v40, %v137
    %v139 = vand.u32 %v138, 4294901760
    %v140 = vsub.f32 %v138, %v139
    %v141 = vand.u32 %v140, 4294901760
    %142 = vmatpush1.msra.mxu0 %v141
    %143 = vmatprep.subr.mxu0 0.0
    %144 = vmatpush1.msra.mxu0 0.0
    %145 = vmatprep.subr.mxu0 0.0
    %146 = vmatpush1.msra.mxu0 0.0
    %147 = vmatprep.subr.mxu0 0.0
    %148 = vmatpush1.msra.mxu0 0.0
    %149 = vmatprep.subr.mxu0 0.0
    %150 = vmatpush1.msra.mxu0 0.0
    %151 = vmatprep.subr.mxu0 0.0
    %152 = vmatpush1.msra.mxu0 0.0
    %153 = vmatprep.subr.mxu0 0.0
    %154 = vmatpush1.msra.mxu0 0.0
    %155 = vmatprep.subr.mxu0 0.0
    %156 = vmatpush1.msra.mxu0 0.0
    %157 = vmatprep.subr.mxu0 0.0
    %158 = vmatpush1.msra.mxu0 0.0
    %159 = vmatprep.subr.mxu0 0.0
    %160 = vmatpush1.msra.mxu0 0.0
    %161 = vmatprep.subr.mxu0 0.0
    %162 = vmatpush1.msra.mxu0 0.0
    %163 = vmatprep.subr.mxu0 0.0
    %164 = vmatpush1.msra.mxu0 0.0
    %165 = vmatprep.subr.mxu0 0.0
    %166 = vmatpush1.msra.mxu0 0.0
    %167 = vmatprep.subr.mxu0 0.0
    %168 = vmatpush1.msra.mxu0 0.0
    %169 = vmatprep.subr.mxu0 0.0
    %170 = vmatpush1.msra.mxu0 0.0
    %171 = vmatprep.subr.mxu0 0.0
    %172 = vmatpush1.msra.mxu0 0.0
    %173 = vmatprep.subr.mxu0 0.0
    %174 = vmatpush1.msra.mxu0 0.0
    %175 = vmatprep.subr.mxu0 0.0
    %176 = vmatpush1.msra.mxu0 0.0
    %177 = vmatprep.subr.mxu0 0.0
    %178 = vmatpush1.msra.mxu0 0.0
    %179 = vmatprep.subr.mxu0 0.0
    %180 = vmatpush1.msra.mxu0 0.0
    %181 = vmatprep.subr.mxu0 0.0
    %182 = vmatpush1.msra.mxu0 0.0
    %183 = vmatprep.subr.mxu0 0.0
    %184 = vmatpush1.msra.mxu0 0.0
    %185 = vmatprep.subr.mxu0 0.0
    %186 = vmatpush1.msra.mxu0 0.0
    %187 = vmatprep.subr.mxu0 0.0
    %188 = vmatpush1.msra.mxu0 0.0
    %189 = vmatprep.subr.mxu0 0.0
    %190 = vmatpush1.msra.mxu0 0.0
    %191 = vmatprep.subr.mxu0 0.0
    %192 = vmatpush1.msra.mxu0 0.0
    %193 = vmatprep.subr.mxu0 0.0
    %194 = vmatpush1.msra.mxu0 0.0
    %195 = vmatprep.subr.mxu0 0.0
    %196 = vmatpush1.msra.mxu0 0.0
    %197 = vmatprep.subr.mxu0 0.0
    %198 = vmatpush1.msra.mxu0 0.0
    %199 = vmatprep.subr.mxu0 0.0
    %200 = vmatpush1.msra.mxu0 0.0
    %201 = vmatprep.subr.mxu0 0.0
    %202 = vmatpush1.msra.mxu0 0.0
    %203 = vmatprep.mubr.f32.mxu0 0.0
    %v204 = vand.u32 %v50, 4294901760
    %205 = vmatmul.mubr.f32.gmra.mrb[0].mxu0 %v204
    %v206 = vpop.f32.mrb[0].mxu0
    %v207 = vadd.f32 %v126, %v206
    %v208 = vpop.f32.mrb[0].mxu0
    %209 = vdwg.mxu0
    %210 = vmatprep.subr.mxu0 0.0
    %v211 = vand.u32 %v39, 4294901760
    %v212 = vsub.f32 %v39, %v211
    %213 = vmatpush1.msra.mxu0 %v212
    %214 = vmatprep.subr.mxu0 0.0
    %v215 = vand.u32 %v40, 4294901760
    %v216 = vsub.f32 %v40, %v215
    %217 = vmatpush1.msra.mxu0 %v216
    %218 = vmatprep.subr.mxu0 0.0
    %219 = vmatpush1.msra.mxu0 0.0
    %220 = vmatprep.subr.mxu0 0.0
    %221 = vmatpush1.msra.mxu0 0.0
    %222 = vmatprep.subr.mxu0 0.0
    %223 = vmatpush1.msra.mxu0 0.0
    %224 = vmatprep.subr.mxu0 0.0
    %225 = vmatpush1.msra.mxu0 0.0
    %226 = vmatprep.subr.mxu0 0.0
    %227 = vmatpush1.msra.mxu0 0.0
    %228 = vmatprep.subr.mxu0 0.0
    %229 = vmatpush1.msra.mxu0 0.0
    %230 = vmatprep.subr.mxu0 0.0
    %231 = vmatpush1.msra.mxu0 0.0
    %232 = vmatprep.subr.mxu0 0.0
    %233 = vmatpush1.msra.mxu0 0.0
    %234 = vmatprep.subr.mxu0 0.0
    %235 = vmatpush1.msra.mxu0 0.0
    %236 = vmatprep.subr.mxu0 0.0
    %237 = vmatpush1.msra.mxu0 0.0
    %238 = vmatprep.subr.mxu0 0.0
    %239 = vmatpush1.msra.mxu0 0.0
    %240 = vmatprep.subr.mxu0 0.0
    %241 = vmatpush1.msra.mxu0 0.0
    %242 = vmatprep.subr.mxu0 0.0
    %243 = vmatpush1.msra.mxu0 0.0
    %244 = vmatprep.subr.mxu0 0.0
    %245 = vmatpush1.msra.mxu0 0.0
    %246 = vmatprep.subr.mxu0 0.0
    %247 = vmatpush1.msra.mxu0 0.0
    %248 = vmatprep.subr.mxu0 0.0
    %249 = vmatpush1.msra.mxu0 0.0
    %250 = vmatprep.subr.mxu0 0.0
    %251 = vmatpush1.msra.mxu0 0.0
    %252 = vmatprep.subr.mxu0 0.0
    %253 = vmatpush1.msra.mxu0 0.0
    %254 = vmatprep.subr.mxu0 0.0
    %255 = vmatpush1.msra.mxu0 0.0
    %256 = vmatprep.subr.mxu0 0.0
    %257 = vmatpush1.msra.mxu0 0.0
    %258 = vmatprep.subr.mxu0 0.0
    %259 = vmatpush1.msra.mxu0 0.0
    %260 = vmatprep.subr.mxu0 0.0
    %261 = vmatpush1.msra.mxu0 0.0
    %262 = vmatprep.subr.mxu0 0.0
    %263 = vmatpush1.msra.mxu0 0.0
    %264 = vmatprep.subr.mxu0 0.0
    %265 = vmatpush1.msra.mxu0 0.0
    %266 = vmatprep.subr.mxu0 0.0
    %267 = vmatpush1.msra.mxu0 0.0
    %268 = vmatprep.subr.mxu0 0.0
    %269 = vmatpush1.msra.mxu0 0.0
    %270 = vmatprep.subr.mxu0 0.0
    %271 = vmatpush1.msra.mxu0 0.0
    %272 = vmatprep.subr.mxu0 0.0
    %273 = vmatpush1.msra.mxu0 0.0
    %274 = vmatprep.subr.mxu0 0.0
    %275 = vmatpush1.msra.mxu0 0.0
    %276 = vmatprep.subr.mxu0 0.0
    %277 = vmatpush1.msra.mxu0 0.0
    %278 = vmatprep.mubr.f32.mxu0 0.0
    %v279 = vand.u32 %v50, 4294901760
    %v280 = vsub.f32 %v50, %v279
    %281 = vmatmul.mubr.f32.gmra.mrb[0].mxu0 %v280
    %v282 = vpop.f32.mrb[0].mxu0
    %v283 = vadd.f32 %v207, %v282
    %v284 = vpop.f32.mrb[0].mxu0
    %285 = vdwg.mxu0
    %286 = vmatprep.subr.mxu0 0.0
    %v287 = vand.u32 %v39, 4294901760
    %288 = vmatpush1.msra.mxu0 %v287
    %289 = vmatprep.subr.mxu0 0.0
    %v290 = vand.u32 %v40, 4294901760
    %291 = vmatpush1.msra.mxu0 %v290
    %292 = vmatprep.subr.mxu0 0.0
    %293 = vmatpush1.msra.mxu0 0.0
    %294 = vmatprep.subr.mxu0 0.0
    %295 = vmatpush1.msra.mxu0 0.0
    %296 = vmatprep.subr.mxu0 0.0
    %297 = vmatpush1.msra.mxu0 0.0
    %298 = vmatprep.subr.mxu0 0.0
    %299 = vmatpush1.msra.mxu0 0.0
    %300 = vmatprep.subr.mxu0 0.0
    %301 = vmatpush1.msra.mxu0 0.0
    %302 = vmatprep.subr.mxu0 0.0
    %303 = vmatpush1.msra.mxu0 0.0
    %304 = vmatprep.subr.mxu0 0.0
    %305 = vmatpush1.msra.mxu0 0.0
    %306 = vmatprep.subr.mxu0 0.0
    %307 = vmatpush1.msra.mxu0 0.0
    %308 = vmatprep.subr.mxu0 0.0
    %309 = vmatpush1.msra.mxu0 0.0
    %310 = vmatprep.subr.mxu0 0.0
    %311 = vmatpush1.msra.mxu0 0.0
    %312 = vmatprep.subr.mxu0 0.0
    %313 = vmatpush1.msra.mxu0 0.0
    %314 = vmatprep.subr.mxu0 0.0
    %315 = vmatpush1.msra.mxu0 0.0
    %316 = vmatprep.subr.mxu0 0.0
    %317 = vmatpush1.msra.mxu0 0.0
    %318 = vmatprep.subr.mxu0 0.0
    %319 = vmatpush1.msra.mxu0 0.0
    %320 = vmatprep.subr.mxu0 0.0
    %321 = vmatpush1.msra.mxu0 0.0
    %322 = vmatprep.subr.mxu0 0.0
    %323 = vmatpush1.msra.mxu0 0.0
    %324 = vmatprep.subr.mxu0 0.0
    %325 = vmatpush1.msra.mxu0 0.0
    %326 = vmatprep.subr.mxu0 0.0
    %327 = vmatpush1.msra.mxu0 0.0
    %328 = vmatprep.subr.mxu0 0.0
    %329 = vmatpush1.msra.mxu0 0.0
    %330 = vmatprep.subr.mxu0 0.0
    %331 = vmatpush1.msra.mxu0 0.0
    %332 = vmatprep.subr.mxu0 0.0
    %333 = vmatpush1.msra.mxu0 0.0
    %334 = vmatprep.subr.mxu0 0.0
    %335 = vmatpush1.msra.mxu0 0.0
    %336 = vmatprep.subr.mxu0 0.0
    %337 = vmatpush1.msra.mxu0 0.0
    %338 = vmatprep.subr.mxu0 0.0
    %339 = vmatpush1.msra.mxu0 0.0
    %340 = vmatprep.subr.mxu0 0.0
    %341 = vmatpush1.msra.mxu0 0.0
    %342 = vmatprep.subr.mxu0 0.0
    %343 = vmatpush1.msra.mxu0 0.0
    %344 = vmatprep.subr.mxu0 0.0
    %345 = vmatpush1.msra.mxu0 0.0
    %346 = vmatprep.subr.mxu0 0.0
    %347 = vmatpush1.msra.mxu0 0.0
    %348 = vmatprep.subr.mxu0 0.0
    %349 = vmatpush1.msra.mxu0 0.0
    %350 = vmatprep.subr.mxu0 0.0
    %351 = vmatpush1.msra.mxu0 0.0
    %352 = vmatprep.mubr.f32.mxu0 0.0
    %v353 = vand.u32 %v50, 4294901760
    %v354 = vsub.f32 %v50, %v353
    %v355 = vand.u32 %v354, 4294901760
    %356 = vmatmul.mubr.f32.gmra.mrb[0].mxu0 %v355
    %v357 = vpop.f32.mrb[0].mxu0
    %v358 = vadd.f32 %v283, %v357
    %v359 = vpop.f32.mrb[0].mxu0
    %360 = vdwg.mxu0
    %361 = vmatprep.subr.mxu0 0.0
    %v362 = vand.u32 %v39, 4294901760
    %v363 = vsub.f32 %v39, %v362
    %v364 = vand.u32 %v363, 4294901760
    %365 = vmatpush1.msra.mxu0 %v364
    %366 = vmatprep.subr.mxu0 0.0
    %v367 = vand.u32 %v40, 4294901760
    %v368 = vsub.f32 %v40, %v367
    %v369 = vand.u32 %v368, 4294901760
    %370 = vmatpush1.msra.mxu0 %v369
    %371 = vmatprep.subr.mxu0 0.0
    %372 = vmatpush1.msra.mxu0 0.0
    %373 = vmatprep.subr.mxu0 0.0
    %374 = vmatpush1.msra.mxu0 0.0
    %375 = vmatprep.subr.mxu0 0.0
    %376 = vmatpush1.msra.mxu0 0.0
    %377 = vmatprep.subr.mxu0 0.0
    %378 = vmatpush1.msra.mxu0 0.0
    %379 = vmatprep.subr.mxu0 0.0
    %380 = vmatpush1.msra.mxu0 0.0
    %381 = vmatprep.subr.mxu0 0.0
    %382 = vmatpush1.msra.mxu0 0.0
    %383 = vmatprep.subr.mxu0 0.0
    %384 = vmatpush1.msra.mxu0 0.0
    %385 = vmatprep.subr.mxu0 0.0
    %386 = vmatpush1.msra.mxu0 0.0
    %387 = vmatprep.subr.mxu0 0.0
    %388 = vmatpush1.msra.mxu0 0.0
    %389 = vmatprep.subr.mxu0 0.0
    %390 = vmatpush1.msra.mxu0 0.0
    %391 = vmatprep.subr.mxu0 0.0
    %392 = vmatpush1.msra.mxu0 0.0
    %393 = vmatprep.subr.mxu0 0.0
    %394 = vmatpush1.msra.mxu0 0.0
    %395 = vmatprep.subr.mxu0 0.0
    %396 = vmatpush1.msra.mxu0 0.0
    %397 = vmatprep.subr.mxu0 0.0
    %398 = vmatpush1.msra.mxu0 0.0
    %399 = vmatprep.subr.mxu0 0.0
    %400 = vmatpush1.msra.mxu0 0.0
    %401 = vmatprep.subr.mxu0 0.0
    %402 = vmatpush1.msra.mxu0 0.0
    %403 = vmatprep.subr.mxu0 0.0
    %404 = vmatpush1.msra.mxu0 0.0
    %405 = vmatprep.subr.mxu0 0.0
    %406 = vmatpush1.msra.mxu0 0.0
    %407 = vmatprep.subr.mxu0 0.0
    %408 = vmatpush1.msra.mxu0 0.0
    %409 = vmatprep.subr.mxu0 0.0
    %410 = vmatpush1.msra.mxu0 0.0
    %411 = vmatprep.subr.mxu0 0.0
    %412 = vmatpush1.msra.mxu0 0.0
    %413 = vmatprep.subr.mxu0 0.0
    %414 = vmatpush1.msra.mxu0 0.0
    %415 = vmatprep.subr.mxu0 0.0
    %416 = vmatpush1.msra.mxu0 0.0
    %417 = vmatprep.subr.mxu0 0.0
    %418 = vmatpush1.msra.mxu0 0.0
    %419 = vmatprep.subr.mxu0 0.0
    %420 = vmatpush1.msra.mxu0 0.0
    %421 = vmatprep.subr.mxu0 0.0
    %422 = vmatpush1.msra.mxu0 0.0
    %423 = vmatprep.subr.mxu0 0.0
    %424 = vmatpush1.msra.mxu0 0.0
    %425 = vmatprep.subr.mxu0 0.0
    %426 = vmatpush1.msra.mxu0 0.0
    %427 = vmatprep.subr.mxu0 0.0
    %428 = vmatpush1.msra.mxu0 0.0
    %429 = vmatprep.subr.mxu0 0.0
    %430 = vmatpush1.msra.mxu0 0.0
    %431 = vmatprep.mubr.f32.mxu0 0.0
    %v432 = vand.u32 %v50, 4294901760
    %433 = vmatmul.mubr.f32.gmra.mrb[0].mxu0 %v432
    %v434 = vpop.f32.mrb[0].mxu0
    %v435 = vadd.f32 %v358, %v434
    %v436 = vpop.f32.mrb[0].mxu0
    %437 = vdwg.mxu0
    %438 = vmatprep.subr.mxu0 0.0
    %v439 = vand.u32 %v39, 4294901760
    %440 = vmatpush1.msra.mxu0 %v439
    %441 = vmatprep.subr.mxu0 0.0
    %v442 = vand.u32 %v40, 4294901760
    %443 = vmatpush1.msra.mxu0 %v442
    %444 = vmatprep.subr.mxu0 0.0
    %445 = vmatpush1.msra.mxu0 0.0
    %446 = vmatprep.subr.mxu0 0.0
    %447 = vmatpush1.msra.mxu0 0.0
    %448 = vmatprep.subr.mxu0 0.0
    %449 = vmatpush1.msra.mxu0 0.0
    %450 = vmatprep.subr.mxu0 0.0
    %451 = vmatpush1.msra.mxu0 0.0
    %452 = vmatprep.subr.mxu0 0.0
    %453 = vmatpush1.msra.mxu0 0.0
    %454 = vmatprep.subr.mxu0 0.0
    %455 = vmatpush1.msra.mxu0 0.0
    %456 = vmatprep.subr.mxu0 0.0
    %457 = vmatpush1.msra.mxu0 0.0
    %458 = vmatprep.subr.mxu0 0.0
    %459 = vmatpush1.msra.mxu0 0.0
    %460 = vmatprep.subr.mxu0 0.0
    %461 = vmatpush1.msra.mxu0 0.0
    %462 = vmatprep.subr.mxu0 0.0
    %463 = vmatpush1.msra.mxu0 0.0
    %464 = vmatprep.subr.mxu0 0.0
    %465 = vmatpush1.msra.mxu0 0.0
    %466 = vmatprep.subr.mxu0 0.0
    %467 = vmatpush1.msra.mxu0 0.0
    %468 = vmatprep.subr.mxu0 0.0
    %469 = vmatpush1.msra.mxu0 0.0
    %470 = vmatprep.subr.mxu0 0.0
    %471 = vmatpush1.msra.mxu0 0.0
    %472 = vmatprep.subr.mxu0 0.0
    %473 = vmatpush1.msra.mxu0 0.0
    %474 = vmatprep.subr.mxu0 0.0
    %475 = vmatpush1.msra.mxu0 0.0
    %476 = vmatprep.subr.mxu0 0.0
    %477 = vmatpush1.msra.mxu0 0.0
    %478 = vmatprep.subr.mxu0 0.0
    %479 = vmatpush1.msra.mxu0 0.0
    %480 = vmatprep.subr.mxu0 0.0
    %481 = vmatpush1.msra.mxu0 0.0
    %482 = vmatprep.subr.mxu0 0.0
    %483 = vmatpush1.msra.mxu0 0.0
    %484 = vmatprep.subr.mxu0 0.0
    %485 = vmatpush1.msra.mxu0 0.0
    %486 = vmatprep.subr.mxu0 0.0
    %487 = vmatpush1.msra.mxu0 0.0
    %488 = vmatprep.subr.mxu0 0.0
    %489 = vmatpush1.msra.mxu0 0.0
    %490 = vmatprep.subr.mxu0 0.0
    %491 = vmatpush1.msra.mxu0 0.0
    %492 = vmatprep.subr.mxu0 0.0
    %493 = vmatpush1.msra.mxu0 0.0
    %494 = vmatprep.subr.mxu0 0.0
    %495 = vmatpush1.msra.mxu0 0.0
    %496 = vmatprep.subr.mxu0 0.0
    %497 = vmatpush1.msra.mxu0 0.0
    %498 = vmatprep.subr.mxu0 0.0
    %499 = vmatpush1.msra.mxu0 0.0
    %500 = vmatprep.subr.mxu0 0.0
    %501 = vmatpush1.msra.mxu0 0.0
    %502 = vmatprep.subr.mxu0 0.0
    %503 = vmatpush1.msra.mxu0 0.0
    %504 = vmatprep.mubr.f32.mxu0 0.0
    %v505 = vand.u32 %v50, 4294901760
    %506 = vmatmul.mubr.f32.gmra.mrb[0].mxu0 %v505
    %v507 = vpop.f32.mrb[0].mxu0
    %v508 = vadd.f32 %v435, %v507
    %v509 = vpop.f32.mrb[0].mxu0
    %510 = vdwg.mxu0
    %v511 = vmax.f32 %v508, 0.0
    %v512 = vld [vmem:[%s3] sm:$0xff]
    %v513 = vld [vmem:[%s3 + $0x8] sm:$0xff]
    %v514 = vld [vmem:[%s3 + $0x10] sm:$0xff]
    %v515 = vld [vmem:[%s3 + $0x18] sm:$0xff]
    %v516 = vld [vmem:[%s3 + $0x20] sm:$0xff]
    %v517 = vld [vmem:[%s3 + $0x28] sm:$0xff]
    %v518 = vld [vmem:[%s3 + $0x30] sm:$0xff]
    %v519 = vld [vmem:[%s3 + $0x38] sm:$0xff]
    %v520 = vld [vmem:[%s3 + $0x40] sm:$0xff]
    %v521 = vld [vmem:[%s3 + $0x48] sm:$0xff]
    %v522 = vld [vmem:[%s3 + $0x50] sm:$0xff]
    %v523 = vld [vmem:[%s3 + $0x58] sm:$0xff]
    %v524 = vld [vmem:[%s3 + $0x60] sm:$0xff]
    %v525 = vld [vmem:[%s3 + $0x68] sm:$0xff]
    %v526 = vld [vmem:[%s3 + $0x70] sm:$0xff]
    %v527 = vld [vmem:[%s3 + $0x78] sm:$0xff]
    %v528 = vld [vmem:[%s4] sm:$0x1]
    %v530 = vlaneseq
    %v531 = vshrl.u32 %v530, 7
    %v532 = vsub.s32 0, %v531
    %v533 = vrot.slane %v528, %v532
    %535 = vmatprep.subr.mxu0 0.0
    %v536 = vand.u32 %v512, 4294901760
    %537 = vmatpush1.msra.mxu0 %v536
    %538 = vmatprep.subr.mxu0 0.0
    %v539 = vand.u32 %v513, 4294901760
    %540 = vmatpush1.msra.mxu0 %v539
    %541 = vmatprep.subr.mxu0 0.0
    %v542 = vand.u32 %v514, 4294901760
    %543 = vmatpush1.msra.mxu0 %v542
    %544 = vmatprep.subr.mxu0 0.0
    %v545 = vand.u32 %v515, 4294901760
    %546 = vmatpush1.msra.mxu0 %v545
    %547 = vmatprep.subr.mxu0 0.0
    %v548 = vand.u32 %v516, 4294901760
    %549 = vmatpush1.msra.mxu0 %v548
    %550 = vmatprep.subr.mxu0 0.0
    %v551 = vand.u32 %v517, 4294901760
    %552 = vmatpush1.msra.mxu0 %v551
    %553 = vmatprep.subr.mxu0 0.0
    %v554 = vand.u32 %v518, 4294901760
    %555 = vmatpush1.msra.mxu0 %v554
    %556 = vmatprep.subr.mxu0 0.0
    %v557 = vand.u32 %v519, 4294901760
    %558 = vmatpush1.msra.mxu0 %v557
    %559 = vmatprep.subr.mxu0 0.0
    %v560 = vand.u32 %v520, 4294901760
    %561 = vmatpush1.msra.mxu0 %v560
    %562 = vmatprep.subr.mxu0 0.0
    %v563 = vand.u32 %v521, 4294901760
    %564 = vmatpush1.msra.mxu0 %v563
    %565 = vmatprep.subr.mxu0 0.0
    %v566 = vand.u32 %v522, 4294901760
    %567 = vmatpush1.msra.mxu0 %v566
    %568 = vmatprep.subr.mxu0 0.0
    %v569 = vand.u32 %v523, 4294901760
    %570 = vmatpush1.msra.mxu0 %v569
    %571 = vmatprep.subr.mxu0 0.0
    %v572 = vand.u32 %v524, 4294901760
    %573 = vmatpush1.msra.mxu0 %v572
    %574 = vmatprep.subr.mxu0 0.0
    %v575 = vand.u32 %v525, 4294901760
    %576 = vmatpush1.msra.mxu0 %v575
    %577 = vmatprep.subr.mxu0 0.0
    %v578 = vand.u32 %v526, 4294901760
    %579 = vmatpush1.msra.mxu0 %v578
    %580 = vmatprep.subr.mxu0 0.0
    %v581 = vand.u32 %v527, 4294901760
    %582 = vmatpush1.msra.mxu0 %v581
    %583 = vmatprep.subr.mxu0 0.0
    %584 = vmatpush1.msra.mxu0 0.0
    %585 = vmatprep.subr.mxu0 0.0
    %586 = vmatpush1.msra.mxu0 0.0
    %587 = vmatprep.subr.mxu0 0.0
    %588 = vmatpush1.msra.mxu0 0.0
    %589 = vmatprep.subr.mxu0 0.0
    %590 = vmatpush1.msra.mxu0 0.0
    %591 = vmatprep.subr.mxu0 0.0
    %592 = vmatpush1.msra.mxu0 0.0
    %593 = vmatprep.subr.mxu0 0.0
    %594 = vmatpush1.msra.mxu0 0.0
    %595 = vmatprep.subr.mxu0 0.0
    %596 = vmatpush1.msra.mxu0 0.0
    %597 = vmatprep.subr.mxu0 0.0
    %598 = vmatpush1.msra.mxu0 0.0
    %599 = vmatprep.subr.mxu0 0.0
    %600 = vmatpush1.msra.mxu0 0.0
    %601 = vmatprep.subr.mxu0 0.0
    %602 = vmatpush1.msra.mxu0 0.0
    %603 = vmatprep.subr.mxu0 0.0
    %604 = vmatpush1.msra.mxu0 0.0
    %605 = vmatprep.subr.mxu0 0.0
    %606 = vmatpush1.msra.mxu0 0.0
    %607 = vmatprep.subr.mxu0 0.0
    %608 = vmatpush1.msra.mxu0 0.0
    %609 = vmatprep.subr.mxu0 0.0
    %610 = vmatpush1.msra.mxu0 0.0
    %611 = vmatprep.subr.mxu0 0.0
    %612 = vmatpush1.msra.mxu0 0.0
    %613 = vmatprep.subr.mxu0 0.0
    %614 = vmatpush1.msra.mxu0 0.0
    %615 = vmatprep.mubr.f32.mxu0 0.0
    %v616 = vand.u32 %v511, 4294901760
    %v617 = vsub.f32 %v511, %v616
    %v618 = vand.u32 %v617, 4294901760
    %v619 = vsub.f32 %v617, %v618
    %v620 = vand.u32 %v619, 4294901760
    %621 = vmatmul.mubr.f32.gmra.mrb[0].mxu0 %v620
    %v622 = vpop.f32.mrb[0].mxu0
    %v623 = vadd.f32 %v533, %v622
    %v624 = vpop.f32.mrb[0].mxu0
    %625 = vdwg.mxu0
    %626 = vmatprep.subr.mxu0 0.0
    %v627 = vand.u32 %v512, 4294901760
    %v628 = vsub.f32 %v512, %v627
    %v629 = vand.u32 %v628, 4294901760
    %v630 = vsub.f32 %v628, %v629
    %v631 = vand.u32 %v630, 4294901760
    %632 = vmatpush1.msra.mxu0 %v631
    %633 = vmatprep.subr.mxu0 0.0
    %v634 = vand.u32 %v513, 4294901760
    %v635 = vsub.f32 %v513, %v634
    %v636 = vand.u32 %v635, 4294901760
    %v637 = vsub.f32 %v635, %v636
    %v638 = vand.u32 %v637, 4294901760
    %639 = vmatpush1.msra.mxu0 %v638
    %640 = vmatprep.subr.mxu0 0.0
    %v641 = vand.u32 %v514, 4294901760
    %v642 = vsub.f32 %v514, %v641
    %v643 = vand.u32 %v642, 4294901760
    %v644 = vsub.f32 %v642, %v643
    %v645 = vand.u32 %v644, 4294901760
    %646 = vmatpush1.msra.mxu0 %v645
    %647 = vmatprep.subr.mxu0 0.0
    %v648 = vand.u32 %v515, 4294901760
    %v649 = vsub.f32 %v515, %v648
    %v650 = vand.u32 %v649, 4294901760
    %v651 = vsub.f32 %v649, %v650
    %v652 = vand.u32 %v651, 4294901760
    %653 = vmatpush1.msra.mxu0 %v652
    %654 = vmatprep.subr.mxu0 0.0
    %v655 = vand.u32 %v516, 4294901760
    %v656 = vsub.f32 %v516, %v655
    %v657 = vand.u32 %v656, 4294901760
    %v658 = vsub.f32 %v656, %v657
    %v659 = vand.u32 %v658, 4294901760
    %660 = vmatpush1.msra.mxu0 %v659
    %661 = vmatprep.subr.mxu0 0.0
    %v662 = vand.u32 %v517, 4294901760
    %v663 = vsub.f32 %v517, %v662
    %v664 = vand.u32 %v663, 4294901760
    %v665 = vsub.f32 %v663, %v664
    %v666 = vand.u32 %v665, 4294901760
    %667 = vmatpush1.msra.mxu0 %v666
    %668 = vmatprep.subr.mxu0 0.0
    %v669 = vand.u32 %v518, 4294901760
    %v670 = vsub.f32 %v518, %v669
    %v671 = vand.u32 %v670, 4294901760
    %v672 = vsub.f32 %v670, %v671
    %v673 = vand.u32 %v672, 4294901760
    %674 = vmatpush1.msra.mxu0 %v673
    %675 = vmatprep.subr.mxu0 0.0
    %v676 = vand.u32 %v519, 4294901760
    %v677 = vsub.f32 %v519, %v676
    %v678 = vand.u32 %v677, 4294901760
    %v679 = vsub.f32 %v677, %v678
    %v680 = vand.u32 %v679, 4294901760
    %681 = vmatpush1.msra.mxu0 %v680
    %682 = vmatprep.subr.mxu0 0.0
    %v683 = vand.u32 %v520, 4294901760
    %v684 = vsub.f32 %v520, %v683
    %v685 = vand.u32 %v684, 4294901760
    %v686 = vsub.f32 %v684, %v685
    %v687 = vand.u32 %v686, 4294901760
    %688 = vmatpush1.msra.mxu0 %v687
    %689 = vmatprep.subr.mxu0 0.0
    %v690 = vand.u32 %v521, 4294901760
    %v691 = vsub.f32 %v521, %v690
    %v692 = vand.u32 %v691, 4294901760
    %v693 = vsub.f32 %v691, %v692
    %v694 = vand.u32 %v693, 4294901760
    %695 = vmatpush1.msra.mxu0 %v694
    %696 = vmatprep.subr.mxu0 0.0
    %v697 = vand.u32 %v522, 4294901760
    %v698 = vsub.f32 %v522, %v697
    %v699 = vand.u32 %v698, 4294901760
    %v700 = vsub.f32 %v698, %v699
    %v701 = vand.u32 %v700, 4294901760
    %702 = vmatpush1.msra.mxu0 %v701
    %703 = vmatprep.subr.mxu0 0.0
    %v704 = vand.u32 %v523, 4294901760
    %v705 = vsub.f32 %v523, %v704
    %v706 = vand.u32 %v705, 4294901760
    %v707 = vsub.f32 %v705, %v706
    %v708 = vand.u32 %v707, 4294901760
    %709 = vmatpush1.msra.mxu0 %v708
    %710 = vmatprep.subr.mxu0 0.0
    %v711 = vand.u32 %v524, 4294901760
    %v712 = vsub.f32 %v524, %v711
    %v713 = vand.u32 %v712, 4294901760
    %v714 = vsub.f32 %v712, %v713
    %v715 = vand.u32 %v714, 4294901760
    %716 = vmatpush1.msra.mxu0 %v715
    %717 = vmatprep.subr.mxu0 0.0
    %v718 = vand.u32 %v525, 4294901760
    %v719 = vsub.f32 %v525, %v718
    %v720 = vand.u32 %v719, 4294901760
    %v721 = vsub.f32 %v719, %v720
    %v722 = vand.u32 %v721, 4294901760
    %723 = vmatpush1.msra.mxu0 %v722
    %724 = vmatprep.subr.mxu0 0.0
    %v725 = vand.u32 %v526, 4294901760
    %v726 = vsub.f32 %v526, %v725
    %v727 = vand.u32 %v726, 4294901760
    %v728 = vsub.f32 %v726, %v727
    %v729 = vand.u32 %v728, 4294901760
    %730 = vmatpush1.msra.mxu0 %v729
    %731 = vmatprep.subr.mxu0 0.0
    %v732 = vand.u32 %v527, 4294901760
    %v733 = vsub.f32 %v527, %v732
    %v734 = vand.u32 %v733, 4294901760
    %v735 = vsub.f32 %v733, %v734
    %v736 = vand.u32 %v735, 4294901760
    %737 = vmatpush1.msra.mxu0 %v736
    %738 = vmatprep.subr.mxu0 0.0
    %739 = vmatpush1.msra.mxu0 0.0
    %740 = vmatprep.subr.mxu0 0.0
    %741 = vmatpush1.msra.mxu0 0.0
    %742 = vmatprep.subr.mxu0 0.0
    %743 = vmatpush1.msra.mxu0 0.0
    %744 = vmatprep.subr.mxu0 0.0
    %745 = vmatpush1.msra.mxu0 0.0
    %746 = vmatprep.subr.mxu0 0.0
    %747 = vmatpush1.msra.mxu0 0.0
    %748 = vmatprep.subr.mxu0 0.0
    %749 = vmatpush1.msra.mxu0 0.0
    %750 = vmatprep.subr.mxu0 0.0
    %751 = vmatpush1.msra.mxu0 0.0
    %752 = vmatprep.subr.mxu0 0.0
    %753 = vmatpush1.msra.mxu0 0.0
    %754 = vmatprep.subr.mxu0 0.0
    %755 = vmatpush1.msra.mxu0 0.0
    %756 = vmatprep.subr.mxu0 0.0
    %757 = vmatpush1.msra.mxu0 0.0
    %758 = vmatprep.subr.mxu0 0.0
    %759 = vmatpush1.msra.mxu0 0.0
    %760 = vmatprep.subr.mxu0 0.0
    %761 = vmatpush1.msra.mxu0 0.0
    %762 = vmatprep.subr.mxu0 0.0
    %763 = vmatpush1.msra.mxu0 0.0
    %764 = vmatprep.subr.mxu0 0.0
    %765 = vmatpush1.msra.mxu0 0.0
    %766 = vmatprep.subr.mxu0 0.0
    %767 = vmatpush1.msra.mxu0 0.0
    %768 = vmatprep.subr.mxu0 0.0
    %769 = vmatpush1.msra.mxu0 0.0
    %770 = vmatprep.mubr.f32.mxu0 0.0
    %v771 = vand.u32 %v511, 4294901760
    %772 = vmatmul.mubr.f32.gmra.mrb[0].mxu0 %v771
    %v773 = vpop.f32.mrb[0].mxu0
    %v774 = vadd.f32 %v623, %v773
    %v775 = vpop.f32.mrb[0].mxu0
    %776 = vdwg.mxu0
    %777 = vmatprep.subr.mxu0 0.0
    %v778 = vand.u32 %v512, 4294901760
    %v779 = vsub.f32 %v512, %v778
    %780 = vmatpush1.msra.mxu0 %v779
    %781 = vmatprep.subr.mxu0 0.0
    %v782 = vand.u32 %v513, 4294901760
    %v783 = vsub.f32 %v513, %v782
    %784 = vmatpush1.msra.mxu0 %v783
    %785 = vmatprep.subr.mxu0 0.0
    %v786 = vand.u32 %v514, 4294901760
    %v787 = vsub.f32 %v514, %v786
    %788 = vmatpush1.msra.mxu0 %v787
    %789 = vmatprep.subr.mxu0 0.0
    %v790 = vand.u32 %v515, 4294901760
    %v791 = vsub.f32 %v515, %v790
    %792 = vmatpush1.msra.mxu0 %v791
    %793 = vmatprep.subr.mxu0 0.0
    %v794 = vand.u32 %v516, 4294901760
    %v795 = vsub.f32 %v516, %v794
    %796 = vmatpush1.msra.mxu0 %v795
    %797 = vmatprep.subr.mxu0 0.0
    %v798 = vand.u32 %v517, 4294901760
    %v799 = vsub.f32 %v517, %v798
    %800 = vmatpush1.msra.mxu0 %v799
    %801 = vmatprep.subr.mxu0 0.0
    %v802 = vand.u32 %v518, 4294901760
    %v803 = vsub.f32 %v518, %v802
    %804 = vmatpush1.msra.mxu0 %v803
    %805 = vmatprep.subr.mxu0 0.0
    %v806 = vand.u32 %v519, 4294901760
    %v807 = vsub.f32 %v519, %v806
    %808 = vmatpush1.msra.mxu0 %v807
    %809 = vmatprep.subr.mxu0 0.0
    %v810 = vand.u32 %v520, 4294901760
    %v811 = vsub.f32 %v520, %v810
    %812 = vmatpush1.msra.mxu0 %v811
    %813 = vmatprep.subr.mxu0 0.0
    %v814 = vand.u32 %v521, 4294901760
    %v815 = vsub.f32 %v521, %v814
    %816 = vmatpush1.msra.mxu0 %v815
    %817 = vmatprep.subr.mxu0 0.0
    %v818 = vand.u32 %v522, 4294901760
    %v819 = vsub.f32 %v522, %v818
    %820 = vmatpush1.msra.mxu0 %v819
    %821 = vmatprep.subr.mxu0 0.0
    %v822 = vand.u32 %v523, 4294901760
    %v823 = vsub.f32 %v523, %v822
    %824 = vmatpush1.msra.mxu0 %v823
    %825 = vmatprep.subr.mxu0 0.0
    %v826 = vand.u32 %v524, 4294901760
    %v827 = vsub.f32 %v524, %v826
    %828 = vmatpush1.msra.mxu0 %v827
    %829 = vmatprep.subr.mxu0 0.0
    %v830 = vand.u32 %v525, 4294901760
    %v831 = vsub.f32 %v525, %v830
    %832 = vmatpush1.msra.mxu0 %v831
    %833 = vmatprep.subr.mxu0 0.0
    %v834 = vand.u32 %v526, 4294901760
    %v835 = vsub.f32 %v526, %v834
    %836 = vmatpush1.msra.mxu0 %v835
    %837 = vmatprep.subr.mxu0 0.0
    %v838 = vand.u32 %v527, 4294901760
    %v839 = vsub.f32 %v527, %v838
    %840 = vmatpush1.msra.mxu0 %v839
    %841 = vmatprep.subr.mxu0 0.0
    %842 = vmatpush1.msra.mxu0 0.0
    %843 = vmatprep.subr.mxu0 0.0
    %844 = vmatpush1.msra.mxu0 0.0
    %845 = vmatprep.subr.mxu0 0.0
    %846 = vmatpush1.msra.mxu0 0.0
    %847 = vmatprep.subr.mxu0 0.0
    %848 = vmatpush1.msra.mxu0 0.0
    %849 = vmatprep.subr.mxu0 0.0
    %850 = vmatpush1.msra.mxu0 0.0
    %851 = vmatprep.subr.mxu0 0.0
    %852 = vmatpush1.msra.mxu0 0.0
    %853 = vmatprep.subr.mxu0 0.0
    %854 = vmatpush1.msra.mxu0 0.0
    %855 = vmatprep.subr.mxu0 0.0
    %856 = vmatpush1.msra.mxu0 0.0
    %857 = vmatprep.subr.mxu0 0.0
    %858 = vmatpush1.msra.mxu0 0.0
    %859 = vmatprep.subr.mxu0 0.0
    %860 = vmatpush1.msra.mxu0 0.0
    %861 = vmatprep.subr.mxu0 0.0
    %862 = vmatpush1.msra.mxu0 0.0
    %863 = vmatprep.subr.mxu0 0.0
    %864 = vmatpush1.msra.mxu0 0.0
    %865 = vmatprep.subr.mxu0 0.0
    %866 = vmatpush1.msra.mxu0 0.0
    %867 = vmatprep.subr.mxu0 0.0
    %868 = vmatpush1.msra.mxu0 0.0
    %869 = vmatprep.subr.mxu0 0.0
    %870 = vmatpush1.msra.mxu0 0.0
    %871 = vmatprep.subr.mxu0 0.0
    %872 = vmatpush1.msra.mxu0 0.0
    %873 = vmatprep.mubr.f32.mxu0 0.0
    %v874 = vand.u32 %v511, 4294901760
    %v875 = vsub.f32 %v511, %v874
    %876 = vmatmul.mubr.f32.gmra.mrb[0].mxu0 %v875
    %v877 = vpop.f32.mrb[0].mxu0
    %v878 = vadd.f32 %v774, %v877
    %v879 = vpop.f32.mrb[0].mxu0
    %880 = vdwg.mxu0
    %881 = vmatprep.subr.mxu0 0.0
    %v882 = vand.u32 %v512, 4294901760
    %883 = vmatpush1.msra.mxu0 %v882
    %884 = vmatprep.subr.mxu0 0.0
    %v885 = vand.u32 %v513, 4294901760
    %886 = vmatpush1.msra.mxu0 %v885
    %887 = vmatprep.subr.mxu0 0.0
    %v888 = vand.u32 %v514, 4294901760
    %889 = vmatpush1.msra.mxu0 %v888
    %890 = vmatprep.subr.mxu0 0.0
    %v891 = vand.u32 %v515, 4294901760
    %892 = vmatpush1.msra.mxu0 %v891
    %893 = vmatprep.subr.mxu0 0.0
    %v894 = vand.u32 %v516, 4294901760
    %895 = vmatpush1.msra.mxu0 %v894
    %896 = vmatprep.subr.mxu0 0.0
    %v897 = vand.u32 %v517, 4294901760
    %898 = vmatpush1.msra.mxu0 %v897
    %899 = vmatprep.subr.mxu0 0.0
    %v900 = vand.u32 %v518, 4294901760
    %901 = vmatpush1.msra.mxu0 %v900
    %902 = vmatprep.subr.mxu0 0.0
    %v903 = vand.u32 %v519, 4294901760
    %904 = vmatpush1.msra.mxu0 %v903
    %905 = vmatprep.subr.mxu0 0.0
    %v906 = vand.u32 %v520, 4294901760
    %907 = vmatpush1.msra.mxu0 %v906
    %908 = vmatprep.subr.mxu0 0.0
    %v909 = vand.u32 %v521, 4294901760
    %910 = vmatpush1.msra.mxu0 %v909
    %911 = vmatprep.subr.mxu0 0.0
    %v912 = vand.u32 %v522, 4294901760
    %913 = vmatpush1.msra.mxu0 %v912
    %914 = vmatprep.subr.mxu0 0.0
    %v915 = vand.u32 %v523, 4294901760
    %916 = vmatpush1.msra.mxu0 %v915
    %917 = vmatprep.subr.mxu0 0.0
    %v918 = vand.u32 %v524, 4294901760
    %919 = vmatpush1.msra.mxu0 %v918
    %920 = vmatprep.subr.mxu0 0.0
    %v921 = vand.u32 %v525, 4294901760
    %922 = vmatpush1.msra.mxu0 %v921
    %923 = vmatprep.subr.mxu0 0.0
    %v924 = vand.u32 %v526, 4294901760
    %925 = vmatpush1.msra.mxu0 %v924
    %926 = vmatprep.subr.mxu0 0.0
    %v927 = vand.u32 %v527, 4294901760
    %928 = vmatpush1.msra.mxu0 %v927
    %929 = vmatprep.subr.mxu0 0.0
    %930 = vmatpush1.msra.mxu0 0.0
    %931 = vmatprep.subr.mxu0 0.0
    %932 = vmatpush1.msra.mxu0 0.0
    %933 = vmatprep.subr.mxu0 0.0
    %934 = vmatpush1.msra.mxu0 0.0
    %935 = vmatprep.subr.mxu0 0.0
    %936 = vmatpush1.msra.mxu0 0.0
    %937 = vmatprep.subr.mxu0 0.0
    %938 = vmatpush1.msra.mxu0 0.0
    %939 = vmatprep.subr.mxu0 0.0
    %940 = vmatpush1.msra.mxu0 0.0
    %941 = vmatprep.subr.mxu0 0.0
    %942 = vmatpush1.msra.mxu0 0.0
    %943 = vmatprep.subr.mxu0 0.0
    %944 = vmatpush1.msra.mxu0 0.0
    %945 = vmatprep.subr.mxu0 0.0
    %946 = vmatpush1.msra.mxu0 0.0
    %947 = vmatprep.subr.mxu0 0.0
    %948 = vmatpush1.msra.mxu0 0.0
    %949 = vmatprep.subr.mxu0 0.0
    %950 = vmatpush1.msra.mxu0 0.0
    %951 = vmatprep.subr.mxu0 0.0
    %952 = vmatpush1.msra.mxu0 0.0
    %953 = vmatprep.subr.mxu0 0.0
    %954 = vmatpush1.msra.mxu0 0.0
    %955 = vmatprep.subr.mxu0 0.0
    %956 = vmatpush1.msra.mxu0 0.0
    %957 = vmatprep.subr.mxu0 0.0
    %958 = vmatpush1.msra.mxu0 0.0
    %959 = vmatprep.subr.mxu0 0.0
    %960 = vmatpush1.msra.mxu0 0.0
    %961 = vmatprep.mubr.f32.mxu0 0.0
    %v962 = vand.u32 %v511, 4294901760
    %v963 = vsub.f32 %v511, %v962
    %v964 = vand.u32 %v963, 4294901760
    %965 = vmatmul.mubr.f32.gmra.mrb[0].mxu0 %v964
    %v966 = vpop.f32.mrb[0].mxu0
    %v967 = vadd.f32 %v878, %v966
    %v968 = vpop.f32.mrb[0].mxu0
    %969 = vdwg.mxu0
    %970 = vmatprep.subr.mxu0 0.0
    %v971 = vand.u32 %v512, 4294901760
    %v972 = vsub.f32 %v512, %v971
    %v973 = vand.u32 %v972, 4294901760
    %974 = vmatpush1.msra.mxu0 %v973
    %975 = vmatprep.subr.mxu0 0.0
    %v976 = vand.u32 %v513, 4294901760
    %v977 = vsub.f32 %v513, %v976
    %v978 = vand.u32 %v977, 4294901760
    %979 = vmatpush1.msra.mxu0 %v978
    %980 = vmatprep.subr.mxu0 0.0
    %v981 = vand.u32 %v514, 4294901760
    %v982 = vsub.f32 %v514, %v981
    %v983 = vand.u32 %v982, 4294901760
    %984 = vmatpush1.msra.mxu0 %v983
    %985 = vmatprep.subr.mxu0 0.0
    %v986 = vand.u32 %v515, 4294901760
    %v987 = vsub.f32 %v515, %v986
    %v988 = vand.u32 %v987, 4294901760
    %989 = vmatpush1.msra.mxu0 %v988
    %990 = vmatprep.subr.mxu0 0.0
    %v991 = vand.u32 %v516, 4294901760
    %v992 = vsub.f32 %v516, %v991
    %v993 = vand.u32 %v992, 4294901760
    %994 = vmatpush1.msra.mxu0 %v993
    %995 = vmatprep.subr.mxu0 0.0
    %v996 = vand.u32 %v517, 4294901760
    %v997 = vsub.f32 %v517, %v996
    %v998 = vand.u32 %v997, 4294901760
    %999 = vmatpush1.msra.mxu0 %v998
    %1000 = vmatprep.subr.mxu0 0.0
    %v1001 = vand.u32 %v518, 4294901760
    %v1002 = vsub.f32 %v518, %v1001
    %v1003 = vand.u32 %v1002, 4294901760
    %1004 = vmatpush1.msra.mxu0 %v1003
    %1005 = vmatprep.subr.mxu0 0.0
    %v1006 = vand.u32 %v519, 4294901760
    %v1007 = vsub.f32 %v519, %v1006
    %v1008 = vand.u32 %v1007, 4294901760
    %1009 = vmatpush1.msra.mxu0 %v1008
    %1010 = vmatprep.subr.mxu0 0.0
    %v1011 = vand.u32 %v520, 4294901760
    %v1012 = vsub.f32 %v520, %v1011
    %v1013 = vand.u32 %v1012, 4294901760
    %1014 = vmatpush1.msra.mxu0 %v1013
    %1015 = vmatprep.subr.mxu0 0.0
    %v1016 = vand.u32 %v521, 4294901760
    %v1017 = vsub.f32 %v521, %v1016
    %v1018 = vand.u32 %v1017, 4294901760
    %1019 = vmatpush1.msra.mxu0 %v1018
    %1020 = vmatprep.subr.mxu0 0.0
    %v1021 = vand.u32 %v522, 4294901760
    %v1022 = vsub.f32 %v522, %v1021
    %v1023 = vand.u32 %v1022, 4294901760
    %1024 = vmatpush1.msra.mxu0 %v1023
    %1025 = vmatprep.subr.mxu0 0.0
    %v1026 = vand.u32 %v523, 4294901760
    %v1027 = vsub.f32 %v523, %v1026
    %v1028 = vand.u32 %v1027, 4294901760
    %1029 = vmatpush1.msra.mxu0 %v1028
    %1030 = vmatprep.subr.mxu0 0.0
    %v1031 = vand.u32 %v524, 4294901760
    %v1032 = vsub.f32 %v524, %v1031
    %v1033 = vand.u32 %v1032, 4294901760
    %1034 = vmatpush1.msra.mxu0 %v1033
    %1035 = vmatprep.subr.mxu0 0.0
    %v1036 = vand.u32 %v525, 4294901760
    %v1037 = vsub.f32 %v525, %v1036
    %v1038 = vand.u32 %v1037, 4294901760
    %1039 = vmatpush1.msra.mxu0 %v1038
    %1040 = vmatprep.subr.mxu0 0.0
    %v1041 = vand.u32 %v526, 4294901760
    %v1042 = vsub.f32 %v526, %v1041
    %v1043 = vand.u32 %v1042, 4294901760
    %1044 = vmatpush1.msra.mxu0 %v1043
    %1045 = vmatprep.subr.mxu0 0.0
    %v1046 = vand.u32 %v527, 4294901760
    %v1047 = vsub.f32 %v527, %v1046
    %v1048 = vand.u32 %v1047, 4294901760
    %1049 = vmatpush1.msra.mxu0 %v1048
    %1050 = vmatprep.subr.mxu0 0.0
    %1051 = vmatpush1.msra.mxu0 0.0
    %1052 = vmatprep.subr.mxu0 0.0
    %1053 = vmatpush1.msra.mxu0 0.0
    %1054 = vmatprep.subr.mxu0 0.0
    %1055 = vmatpush1.msra.mxu0 0.0
    %1056 = vmatprep.subr.mxu0 0.0
    %1057 = vmatpush1.msra.mxu0 0.0
    %1058 = vmatprep.subr.mxu0 0.0
    %1059 = vmatpush1.msra.mxu0 0.0
    %1060 = vmatprep.subr.mxu0 0.0
    %1061 = vmatpush1.msra.mxu0 0.0
    %1062 = vmatprep.subr.mxu0 0.0
    %1063 = vmatpush1.msra.mxu0 0.0
    %1064 = vmatprep.subr.mxu0 0.0
    %1065 = vmatpush1.msra.mxu0 0.0
    %1066 = vmatprep.subr.mxu0 0.0
    %1067 = vmatpush1.msra.mxu0 0.0
    %1068 = vmatprep.subr.mxu0 0.0
    %1069 = vmatpush1.msra.mxu0 0.0
    %1070 = vmatprep.subr.mxu0 0.0
    %1071 = vmatpush1.msra.mxu0 0.0
    %1072 = vmatprep.subr.mxu0 0.0
    %1073 = vmatpush1.msra.mxu0 0.0
    %1074 = vmatprep.subr.mxu0 0.0
    %1075 = vmatpush1.msra.mxu0 0.0
    %1076 = vmatprep.subr.mxu0 0.0
    %1077 = vmatpush1.msra.mxu0 0.0
    %1078 = vmatprep.subr.mxu0 0.0
    %1079 = vmatpush1.msra.mxu0 0.0
    %1080 = vmatprep.subr.mxu0 0.0
    %1081 = vmatpush1.msra.mxu0 0.0
    %1082 = vmatprep.mubr.f32.mxu0 0.0
    %v1083 = vand.u32 %v511, 4294901760
    %1084 = vmatmul.mubr.f32.gmra.mrb[0].mxu0 %v1083
    %v1085 = vpop.f32.mrb[0].mxu0
    %v1086 = vadd.f32 %v967, %v1085
    %v1087 = vpop.f32.mrb[0].mxu0
    %1088 = vdwg.mxu0
    %1089 = vmatprep.subr.mxu0 0.0
    %v1090 = vand.u32 %v512, 4294901760
    %1091 = vmatpush1.msra.mxu0 %v1090
    %1092 = vmatprep.subr.mxu0 0.0
    %v1093 = vand.u32 %v513, 4294901760
    %1094 = vmatpush1.msra.mxu0 %v1093
    %1095 = vmatprep.subr.mxu0 0.0
    %v1096 = vand.u32 %v514, 4294901760
    %1097 = vmatpush1.msra.mxu0 %v1096
    %1098 = vmatprep.subr.mxu0 0.0
    %v1099 = vand.u32 %v515, 4294901760
    %1100 = vmatpush1.msra.mxu0 %v1099
    %1101 = vmatprep.subr.mxu0 0.0
    %v1102 = vand.u32 %v516, 4294901760
    %1103 = vmatpush1.msra.mxu0 %v1102
    %1104 = vmatprep.subr.mxu0 0.0
    %v1105 = vand.u32 %v517, 4294901760
    %1106 = vmatpush1.msra.mxu0 %v1105
    %1107 = vmatprep.subr.mxu0 0.0
    %v1108 = vand.u32 %v518, 4294901760
    %1109 = vmatpush1.msra.mxu0 %v1108
    %1110 = vmatprep.subr.mxu0 0.0
    %v1111 = vand.u32 %v519, 4294901760
    %1112 = vmatpush1.msra.mxu0 %v1111
    %1113 = vmatprep.subr.mxu0 0.0
    %v1114 = vand.u32 %v520, 4294901760
    %1115 = vmatpush1.msra.mxu0 %v1114
    %1116 = vmatprep.subr.mxu0 0.0
    %v1117 = vand.u32 %v521, 4294901760
    %1118 = vmatpush1.msra.mxu0 %v1117
    %1119 = vmatprep.subr.mxu0 0.0
    %v1120 = vand.u32 %v522, 4294901760
    %1121 = vmatpush1.msra.mxu0 %v1120
    %1122 = vmatprep.subr.mxu0 0.0
    %v1123 = vand.u32 %v523, 4294901760
    %1124 = vmatpush1.msra.mxu0 %v1123
    %1125 = vmatprep.subr.mxu0 0.0
    %v1126 = vand.u32 %v524, 4294901760
    %1127 = vmatpush1.msra.mxu0 %v1126
    %1128 = vmatprep.subr.mxu0 0.0
    %v1129 = vand.u32 %v525, 4294901760
    %1130 = vmatpush1.msra.mxu0 %v1129
    %1131 = vmatprep.subr.mxu0 0.0
    %v1132 = vand.u32 %v526, 4294901760
    %1133 = vmatpush1.msra.mxu0 %v1132
    %1134 = vmatprep.subr.mxu0 0.0
    %v1135 = vand.u32 %v527, 4294901760
    %1136 = vmatpush1.msra.mxu0 %v1135
    %1137 = vmatprep.subr.mxu0 0.0
    %1138 = vmatpush1.msra.mxu0 0.0
    %1139 = vmatprep.subr.mxu0 0.0
    %1140 = vmatpush1.msra.mxu0 0.0
    %1141 = vmatprep.subr.mxu0 0.0
    %1142 = vmatpush1.msra.mxu0 0.0
    %1143 = vmatprep.subr.mxu0 0.0
    %1144 = vmatpush1.msra.mxu0 0.0
    %1145 = vmatprep.subr.mxu0 0.0
    %1146 = vmatpush1.msra.mxu0 0.0
    %1147 = vmatprep.subr.mxu0 0.0
    %1148 = vmatpush1.msra.mxu0 0.0
    %1149 = vmatprep.subr.mxu0 0.0
    %1150 = vmatpush1.msra.mxu0 0.0
    %1151 = vmatprep.subr.mxu0 0.0
    %1152 = vmatpush1.msra.mxu0 0.0
    %1153 = vmatprep.subr.mxu0 0.0
    %1154 = vmatpush1.msra.mxu0 0.0
    %1155 = vmatprep.subr.mxu0 0.0
    %1156 = vmatpush1.msra.mxu0 0.0
    %1157 = vmatprep.subr.mxu0 0.0
    %1158 = vmatpush1.msra.mxu0 0.0
    %1159 = vmatprep.subr.mxu0 0.0
    %1160 = vmatpush1.msra.mxu0 0.0
    %1161 = vmatprep.subr.mxu0 0.0
    %1162 = vmatpush1.msra.mxu0 0.0
    %1163 = vmatprep.subr.mxu0 0.0
    %1164 = vmatpush1.msra.mxu0 0.0
    %1165 = vmatprep.subr.mxu0 0.0
    %1166 = vmatpush1.msra.mxu0 0.0
    %1167 = vmatprep.subr.mxu0 0.0
    %1168 = vmatpush1.msra.mxu0 0.0
    %1169 = vmatprep.mubr.f32.mxu0 0.0
    %v1170 = vand.u32 %v511, 4294901760
    %1171 = vmatmul.mubr.f32.gmra.mrb[0].mxu0 %v1170
    %v1172 = vpop.f32.mrb[0].mxu0
    %v1173 = vadd.f32 %v1086, %v1172
    %v1174 = vpop.f32.mrb[0].mxu0
    %1175 = vdwg.mxu0
    %v1176 = vmax.f32 %v1173, 0.0
    %v1177 = vld [vmem:[%s5] sm:$0xff]
    %v1178 = vld [vmem:[%s5 + $0x8] sm:$0xff]
    %v1179 = vld [vmem:[%s5 + $0x10] sm:$0xff]
    %v1180 = vld [vmem:[%s5 + $0x18] sm:$0xff]
    %v1181 = vld [vmem:[%s5 + $0x20] sm:$0xff]
    %v1182 = vld [vmem:[%s5 + $0x28] sm:$0xff]
    %v1183 = vld [vmem:[%s5 + $0x30] sm:$0xff]
    %v1184 = vld [vmem:[%s5 + $0x38] sm:$0xff]
    %v1185 = vld [vmem:[%s5 + $0x40] sm:$0xff]
    %v1186 = vld [vmem:[%s5 + $0x48] sm:$0xff]
    %v1187 = vld [vmem:[%s5 + $0x50] sm:$0xff]
    %v1188 = vld [vmem:[%s5 + $0x58] sm:$0xff]
    %v1189 = vld [vmem:[%s5 + $0x60] sm:$0xff]
    %v1190 = vld [vmem:[%s5 + $0x68] sm:$0xff]
    %v1191 = vld [vmem:[%s5 + $0x70] sm:$0xff]
    %v1192 = vld [vmem:[%s5 + $0x78] sm:$0xff]
    %v1193 = vld [vmem:[%s6] sm:$0x1]
    %v1195 = vlaneseq
    %v1196 = vshrl.u32 %v1195, 7
    %v1197 = vsub.s32 0, %v1196
    %v1198 = vrot.slane %v1193, %v1197
    %1200 = vmatprep.subr.mxu0 0.0
    %v1201 = vand.u32 %v1177, 4294901760
    %1202 = vmatpush1.msra.mxu0 %v1201
    %1203 = vmatprep.subr.mxu0 0.0
    %v1204 = vand.u32 %v1178, 4294901760
    %1205 = vmatpush1.msra.mxu0 %v1204
    %1206 = vmatprep.subr.mxu0 0.0
    %v1207 = vand.u32 %v1179, 4294901760
    %1208 = vmatpush1.msra.mxu0 %v1207
    %1209 = vmatprep.subr.mxu0 0.0
    %v1210 = vand.u32 %v1180, 4294901760
    %1211 = vmatpush1.msra.mxu0 %v1210
    %1212 = vmatprep.subr.mxu0 0.0
    %v1213 = vand.u32 %v1181, 4294901760
    %1214 = vmatpush1.msra.mxu0 %v1213
    %1215 = vmatprep.subr.mxu0 0.0
    %v1216 = vand.u32 %v1182, 4294901760
    %1217 = vmatpush1.msra.mxu0 %v1216
    %1218 = vmatprep.subr.mxu0 0.0
    %v1219 = vand.u32 %v1183, 4294901760
    %1220 = vmatpush1.msra.mxu0 %v1219
    %1221 = vmatprep.subr.mxu0 0.0
    %v1222 = vand.u32 %v1184, 4294901760
    %1223 = vmatpush1.msra.mxu0 %v1222
    %1224 = vmatprep.subr.mxu0 0.0
    %v1225 = vand.u32 %v1185, 4294901760
    %1226 = vmatpush1.msra.mxu0 %v1225
    %1227 = vmatprep.subr.mxu0 0.0
    %v1228 = vand.u32 %v1186, 4294901760
    %1229 = vmatpush1.msra.mxu0 %v1228
    %1230 = vmatprep.subr.mxu0 0.0
    %v1231 = vand.u32 %v1187, 4294901760
    %1232 = vmatpush1.msra.mxu0 %v1231
    %1233 = vmatprep.subr.mxu0 0.0
    %v1234 = vand.u32 %v1188, 4294901760
    %1235 = vmatpush1.msra.mxu0 %v1234
    %1236 = vmatprep.subr.mxu0 0.0
    %v1237 = vand.u32 %v1189, 4294901760
    %1238 = vmatpush1.msra.mxu0 %v1237
    %1239 = vmatprep.subr.mxu0 0.0
    %v1240 = vand.u32 %v1190, 4294901760
    %1241 = vmatpush1.msra.mxu0 %v1240
    %1242 = vmatprep.subr.mxu0 0.0
    %v1243 = vand.u32 %v1191, 4294901760
    %1244 = vmatpush1.msra.mxu0 %v1243
    %1245 = vmatprep.subr.mxu0 0.0
    %v1246 = vand.u32 %v1192, 4294901760
    %1247 = vmatpush1.msra.mxu0 %v1246
    %1248 = vmatprep.subr.mxu0 0.0
    %1249 = vmatpush1.msra.mxu0 0.0
    %1250 = vmatprep.subr.mxu0 0.0
    %1251 = vmatpush1.msra.mxu0 0.0
    %1252 = vmatprep.subr.mxu0 0.0
    %1253 = vmatpush1.msra.mxu0 0.0
    %1254 = vmatprep.subr.mxu0 0.0
    %1255 = vmatpush1.msra.mxu0 0.0
    %1256 = vmatprep.subr.mxu0 0.0
    %1257 = vmatpush1.msra.mxu0 0.0
    %1258 = vmatprep.subr.mxu0 0.0
    %1259 = vmatpush1.msra.mxu0 0.0
    %1260 = vmatprep.subr.mxu0 0.0
    %1261 = vmatpush1.msra.mxu0 0.0
    %1262 = vmatprep.subr.mxu0 0.0
    %1263 = vmatpush1.msra.mxu0 0.0
    %1264 = vmatprep.subr.mxu0 0.0
    %1265 = vmatpush1.msra.mxu0 0.0
    %1266 = vmatprep.subr.mxu0 0.0
    %1267 = vmatpush1.msra.mxu0 0.0
    %1268 = vmatprep.subr.mxu0 0.0
    %1269 = vmatpush1.msra.mxu0 0.0
    %1270 = vmatprep.subr.mxu0 0.0
    %1271 = vmatpush1.msra.mxu0 0.0
    %1272 = vmatprep.subr.mxu0 0.0
    %1273 = vmatpush1.msra.mxu0 0.0
    %1274 = vmatprep.subr.mxu0 0.0
    %1275 = vmatpush1.msra.mxu0 0.0
    %1276 = vmatprep.subr.mxu0 0.0
    %1277 = vmatpush1.msra.mxu0 0.0
    %1278 = vmatprep.subr.mxu0 0.0
    %1279 = vmatpush1.msra.mxu0 0.0
    %1280 = vmatprep.mubr.f32.mxu0 0.0
    %v1281 = vand.u32 %v1176, 4294901760
    %v1282 = vsub.f32 %v1176, %v1281
    %v1283 = vand.u32 %v1282, 4294901760
    %v1284 = vsub.f32 %v1282, %v1283
    %v1285 = vand.u32 %v1284, 4294901760
    %1286 = vmatmul.mubr.f32.gmra.mrb[0].mxu0 %v1285
    %v1287 = vpop.f32.mrb[0].mxu0
    %v1288 = vadd.f32 %v1198, %v1287
    %v1289 = vpop.f32.mrb[0].mxu0
    %1290 = vdwg.mxu0
    %1291 = vmatprep.subr.mxu0 0.0
    %v1292 = vand.u32 %v1177, 4294901760
    %v1293 = vsub.f32 %v1177, %v1292
    %v1294 = vand.u32 %v1293, 4294901760
    %v1295 = vsub.f32 %v1293, %v1294
    %v1296 = vand.u32 %v1295, 4294901760
    %1297 = vmatpush1.msra.mxu0 %v1296
    %1298 = vmatprep.subr.mxu0 0.0
    %v1299 = vand.u32 %v1178, 4294901760
    %v1300 = vsub.f32 %v1178, %v1299
    %v1301 = vand.u32 %v1300, 4294901760
    %v1302 = vsub.f32 %v1300, %v1301
    %v1303 = vand.u32 %v1302, 4294901760
    %1304 = vmatpush1.msra.mxu0 %v1303
    %1305 = vmatprep.subr.mxu0 0.0
    %v1306 = vand.u32 %v1179, 4294901760
    %v1307 = vsub.f32 %v1179, %v1306
    %v1308 = vand.u32 %v1307, 4294901760
    %v1309 = vsub.f32 %v1307, %v1308
    %v1310 = vand.u32 %v1309, 4294901760
    %1311 = vmatpush1.msra.mxu0 %v1310
    %1312 = vmatprep.subr.mxu0 0.0
    %v1313 = vand.u32 %v1180, 4294901760
    %v1314 = vsub.f32 %v1180, %v1313
    %v1315 = vand.u32 %v1314, 4294901760
    %v1316 = vsub.f32 %v1314, %v1315
    %v1317 = vand.u32 %v1316, 4294901760
    %1318 = vmatpush1.msra.mxu0 %v1317
    %1319 = vmatprep.subr.mxu0 0.0
    %v1320 = vand.u32 %v1181, 4294901760
    %v1321 = vsub.f32 %v1181, %v1320
    %v1322 = vand.u32 %v1321, 4294901760
    %v1323 = vsub.f32 %v1321, %v1322
    %v1324 = vand.u32 %v1323, 4294901760
    %1325 = vmatpush1.msra.mxu0 %v1324
    %1326 = vmatprep.subr.mxu0 0.0
    %v1327 = vand.u32 %v1182, 4294901760
    %v1328 = vsub.f32 %v1182, %v1327
    %v1329 = vand.u32 %v1328, 4294901760
    %v1330 = vsub.f32 %v1328, %v1329
    %v1331 = vand.u32 %v1330, 4294901760
    %1332 = vmatpush1.msra.mxu0 %v1331
    %1333 = vmatprep.subr.mxu0 0.0
    %v1334 = vand.u32 %v1183, 4294901760
    %v1335 = vsub.f32 %v1183, %v1334
    %v1336 = vand.u32 %v1335, 4294901760
    %v1337 = vsub.f32 %v1335, %v1336
    %v1338 = vand.u32 %v1337, 4294901760
    %1339 = vmatpush1.msra.mxu0 %v1338
    %1340 = vmatprep.subr.mxu0 0.0
    %v1341 = vand.u32 %v1184, 4294901760
    %v1342 = vsub.f32 %v1184, %v1341
    %v1343 = vand.u32 %v1342, 4294901760
    %v1344 = vsub.f32 %v1342, %v1343
    %v1345 = vand.u32 %v1344, 4294901760
    %1346 = vmatpush1.msra.mxu0 %v1345
    %1347 = vmatprep.subr.mxu0 0.0
    %v1348 = vand.u32 %v1185, 4294901760
    %v1349 = vsub.f32 %v1185, %v1348
    %v1350 = vand.u32 %v1349, 4294901760
    %v1351 = vsub.f32 %v1349, %v1350
    %v1352 = vand.u32 %v1351, 4294901760
    %1353 = vmatpush1.msra.mxu0 %v1352
    %1354 = vmatprep.subr.mxu0 0.0
    %v1355 = vand.u32 %v1186, 4294901760
    %v1356 = vsub.f32 %v1186, %v1355
    %v1357 = vand.u32 %v1356, 4294901760
    %v1358 = vsub.f32 %v1356, %v1357
    %v1359 = vand.u32 %v1358, 4294901760
    %1360 = vmatpush1.msra.mxu0 %v1359
    %1361 = vmatprep.subr.mxu0 0.0
    %v1362 = vand.u32 %v1187, 4294901760
    %v1363 = vsub.f32 %v1187, %v1362
    %v1364 = vand.u32 %v1363, 4294901760
    %v1365 = vsub.f32 %v1363, %v1364
    %v1366 = vand.u32 %v1365, 4294901760
    %1367 = vmatpush1.msra.mxu0 %v1366
    %1368 = vmatprep.subr.mxu0 0.0
    %v1369 = vand.u32 %v1188, 4294901760
    %v1370 = vsub.f32 %v1188, %v1369
    %v1371 = vand.u32 %v1370, 4294901760
    %v1372 = vsub.f32 %v1370, %v1371
    %v1373 = vand.u32 %v1372, 4294901760
    %1374 = vmatpush1.msra.mxu0 %v1373
    %1375 = vmatprep.subr.mxu0 0.0
    %v1376 = vand.u32 %v1189, 4294901760
    %v1377 = vsub.f32 %v1189, %v1376
    %v1378 = vand.u32 %v1377, 4294901760
    %v1379 = vsub.f32 %v1377, %v1378
    %v1380 = vand.u32 %v1379, 4294901760
    %1381 = vmatpush1.msra.mxu0 %v1380
    %1382 = vmatprep.subr.mxu0 0.0
    %v1383 = vand.u32 %v1190, 4294901760
    %v1384 = vsub.f32 %v1190, %v1383
    %v1385 = vand.u32 %v1384, 4294901760
    %v1386 = vsub.f32 %v1384, %v1385
    %v1387 = vand.u32 %v1386, 4294901760
    %1388 = vmatpush1.msra.mxu0 %v1387
    %1389 = vmatprep.subr.mxu0 0.0
    %v1390 = vand.u32 %v1191, 4294901760
    %v1391 = vsub.f32 %v1191, %v1390
    %v1392 = vand.u32 %v1391, 4294901760
    %v1393 = vsub.f32 %v1391, %v1392
    %v1394 = vand.u32 %v1393, 4294901760
    %1395 = vmatpush1.msra.mxu0 %v1394
    %1396 = vmatprep.subr.mxu0 0.0
    %v1397 = vand.u32 %v1192, 4294901760
    %v1398 = vsub.f32 %v1192, %v1397
    %v1399 = vand.u32 %v1398, 4294901760
    %v1400 = vsub.f32 %v1398, %v1399
    %v1401 = vand.u32 %v1400, 4294901760
    %1402 = vmatpush1.msra.mxu0 %v1401
    %1403 = vmatprep.subr.mxu0 0.0
    %1404 = vmatpush1.msra.mxu0 0.0
    %1405 = vmatprep.subr.mxu0 0.0
    %1406 = vmatpush1.msra.mxu0 0.0
    %1407 = vmatprep.subr.mxu0 0.0
    %1408 = vmatpush1.msra.mxu0 0.0
    %1409 = vmatprep.subr.mxu0 0.0
    %1410 = vmatpush1.msra.mxu0 0.0
    %1411 = vmatprep.subr.mxu0 0.0
    %1412 = vmatpush1.msra.mxu0 0.0
    %1413 = vmatprep.subr.mxu0 0.0
    %1414 = vmatpush1.msra.mxu0 0.0
    %1415 = vmatprep.subr.mxu0 0.0
    %1416 = vmatpush1.msra.mxu0 0.0
    %1417 = vmatprep.subr.mxu0 0.0
    %1418 = vmatpush1.msra.mxu0 0.0
    %1419 = vmatprep.subr.mxu0 0.0
    %1420 = vmatpush1.msra.mxu0 0.0
    %1421 = vmatprep.subr.mxu0 0.0
    %1422 = vmatpush1.msra.mxu0 0.0
    %1423 = vmatprep.subr.mxu0 0.0
    %1424 = vmatpush1.msra.mxu0 0.0
    %1425 = vmatprep.subr.mxu0 0.0
    %1426 = vmatpush1.msra.mxu0 0.0
    %1427 = vmatprep.subr.mxu0 0.0
    %1428 = vmatpush1.msra.mxu0 0.0
    %1429 = vmatprep.subr.mxu0 0.0
    %1430 = vmatpush1.msra.mxu0 0.0
    %1431 = vmatprep.subr.mxu0 0.0
    %1432 = vmatpush1.msra.mxu0 0.0
    %1433 = vmatprep.subr.mxu0 0.0
    %1434 = vmatpush1.msra.mxu0 0.0
    %1435 = vmatprep.mubr.f32.mxu0 0.0
    %v1436 = vand.u32 %v1176, 4294901760
    %1437 = vmatmul.mubr.f32.gmra.mrb[0].mxu0 %v1436
    %v1438 = vpop.f32.mrb[0].mxu0
    %v1439 = vadd.f32 %v1288, %v1438
    %v1440 = vpop.f32.mrb[0].mxu0
    %1441 = vdwg.mxu0
    %1442 = vmatprep.subr.mxu0 0.0
    %v1443 = vand.u32 %v1177, 4294901760
    %v1444 = vsub.f32 %v1177, %v1443
    %1445 = vmatpush1.msra.mxu0 %v1444
    %1446 = vmatprep.subr.mxu0 0.0
    %v1447 = vand.u32 %v1178, 4294901760
    %v1448 = vsub.f32 %v1178, %v1447
    %1449 = vmatpush1.msra.mxu0 %v1448
    %1450 = vmatprep.subr.mxu0 0.0
    %v1451 = vand.u32 %v1179, 4294901760
    %v1452 = vsub.f32 %v1179, %v1451
    %1453 = vmatpush1.msra.mxu0 %v1452
    %1454 = vmatprep.subr.mxu0 0.0
    %v1455 = vand.u32 %v1180, 4294901760
    %v1456 = vsub.f32 %v1180, %v1455
    %1457 = vmatpush1.msra.mxu0 %v1456
    %1458 = vmatprep.subr.mxu0 0.0
    %v1459 = vand.u32 %v1181, 4294901760
    %v1460 = vsub.f32 %v1181, %v1459
    %1461 = vmatpush1.msra.mxu0 %v1460
    %1462 = vmatprep.subr.mxu0 0.0
    %v1463 = vand.u32 %v1182, 4294901760
    %v1464 = vsub.f32 %v1182, %v1463
    %1465 = vmatpush1.msra.mxu0 %v1464
    %1466 = vmatprep.subr.mxu0 0.0
    %v1467 = vand.u32 %v1183, 4294901760
    %v1468 = vsub.f32 %v1183, %v1467
    %1469 = vmatpush1.msra.mxu0 %v1468
    %1470 = vmatprep.subr.mxu0 0.0
    %v1471 = vand.u32 %v1184, 4294901760
    %v1472 = vsub.f32 %v1184, %v1471
    %1473 = vmatpush1.msra.mxu0 %v1472
    %1474 = vmatprep.subr.mxu0 0.0
    %v1475 = vand.u32 %v1185, 4294901760
    %v1476 = vsub.f32 %v1185, %v1475
    %1477 = vmatpush1.msra.mxu0 %v1476
    %1478 = vmatprep.subr.mxu0 0.0
    %v1479 = vand.u32 %v1186, 4294901760
    %v1480 = vsub.f32 %v1186, %v1479
    %1481 = vmatpush1.msra.mxu0 %v1480
    %1482 = vmatprep.subr.mxu0 0.0
    %v1483 = vand.u32 %v1187, 4294901760
    %v1484 = vsub.f32 %v1187, %v1483
    %1485 = vmatpush1.msra.mxu0 %v1484
    %1486 = vmatprep.subr.mxu0 0.0
    %v1487 = vand.u32 %v1188, 4294901760
    %v1488 = vsub.f32 %v1188, %v1487
    %1489 = vmatpush1.msra.mxu0 %v1488
    %1490 = vmatprep.subr.mxu0 0.0
    %v1491 = vand.u32 %v1189, 4294901760
    %v1492 = vsub.f32 %v1189, %v1491
    %1493 = vmatpush1.msra.mxu0 %v1492
    %1494 = vmatprep.subr.mxu0 0.0
    %v1495 = vand.u32 %v1190, 4294901760
    %v1496 = vsub.f32 %v1190, %v1495
    %1497 = vmatpush1.msra.mxu0 %v1496
    %1498 = vmatprep.subr.mxu0 0.0
    %v1499 = vand.u32 %v1191, 4294901760
    %v1500 = vsub.f32 %v1191, %v1499
    %1501 = vmatpush1.msra.mxu0 %v1500
    %1502 = vmatprep.subr.mxu0 0.0
    %v1503 = vand.u32 %v1192, 4294901760
    %v1504 = vsub.f32 %v1192, %v1503
    %1505 = vmatpush1.msra.mxu0 %v1504
    %1506 = vmatprep.subr.mxu0 0.0
    %1507 = vmatpush1.msra.mxu0 0.0
    %1508 = vmatprep.subr.mxu0 0.0
    %1509 = vmatpush1.msra.mxu0 0.0
    %1510 = vmatprep.subr.mxu0 0.0
    %1511 = vmatpush1.msra.mxu0 0.0
    %1512 = vmatprep.subr.mxu0 0.0
    %1513 = vmatpush1.msra.mxu0 0.0
    %1514 = vmatprep.subr.mxu0 0.0
    %1515 = vmatpush1.msra.mxu0 0.0
    %1516 = vmatprep.subr.mxu0 0.0
    %1517 = vmatpush1.msra.mxu0 0.0
    %1518 = vmatprep.subr.mxu0 0.0
    %1519 = vmatpush1.msra.mxu0 0.0
    %1520 = vmatprep.subr.mxu0 0.0
    %1521 = vmatpush1.msra.mxu0 0.0
    %1522 = vmatprep.subr.mxu0 0.0
    %1523 = vmatpush1.msra.mxu0 0.0
    %1524 = vmatprep.subr.mxu0 0.0
    %1525 = vmatpush1.msra.mxu0 0.0
    %1526 = vmatprep.subr.mxu0 0.0
    %1527 = vmatpush1.msra.mxu0 0.0
    %1528 = vmatprep.subr.mxu0 0.0
    %1529 = vmatpush1.msra.mxu0 0.0
    %1530 = vmatprep.subr.mxu0 0.0
    %1531 = vmatpush1.msra.mxu0 0.0
    %1532 = vmatprep.subr.mxu0 0.0
    %1533 = vmatpush1.msra.mxu0 0.0
    %1534 = vmatprep.subr.mxu0 0.0
    %1535 = vmatpush1.msra.mxu0 0.0
    %1536 = vmatprep.subr.mxu0 0.0
    %1537 = vmatpush1.msra.mxu0 0.0
    %1538 = vmatprep.mubr.f32.mxu0 0.0
    %v1539 = vand.u32 %v1176, 4294901760
    %v1540 = vsub.f32 %v1176, %v1539
    %1541 = vmatmul.mubr.f32.gmra.mrb[0].mxu0 %v1540
    %v1542 = vpop.f32.mrb[0].mxu0
    %v1543 = vadd.f32 %v1439, %v1542
    %v1544 = vpop.f32.mrb[0].mxu0
    %1545 = vdwg.mxu0
    %1546 = vmatprep.subr.mxu0 0.0
    %v1547 = vand.u32 %v1177, 4294901760
    %1548 = vmatpush1.msra.mxu0 %v1547
    %1549 = vmatprep.subr.mxu0 0.0
    %v1550 = vand.u32 %v1178, 4294901760
    %1551 = vmatpush1.msra.mxu0 %v1550
    %1552 = vmatprep.subr.mxu0 0.0
    %v1553 = vand.u32 %v1179, 4294901760
    %1554 = vmatpush1.msra.mxu0 %v1553
    %1555 = vmatprep.subr.mxu0 0.0
    %v1556 = vand.u32 %v1180, 4294901760
    %1557 = vmatpush1.msra.mxu0 %v1556
    %1558 = vmatprep.subr.mxu0 0.0
    %v1559 = vand.u32 %v1181, 4294901760
    %1560 = vmatpush1.msra.mxu0 %v1559
    %1561 = vmatprep.subr.mxu0 0.0
    %v1562 = vand.u32 %v1182, 4294901760
    %1563 = vmatpush1.msra.mxu0 %v1562
    %1564 = vmatprep.subr.mxu0 0.0
    %v1565 = vand.u32 %v1183, 4294901760
    %1566 = vmatpush1.msra.mxu0 %v1565
    %1567 = vmatprep.subr.mxu0 0.0
    %v1568 = vand.u32 %v1184, 4294901760
    %1569 = vmatpush1.msra.mxu0 %v1568
    %1570 = vmatprep.subr.mxu0 0.0
    %v1571 = vand.u32 %v1185, 4294901760
    %1572 = vmatpush1.msra.mxu0 %v1571
    %1573 = vmatprep.subr.mxu0 0.0
    %v1574 = vand.u32 %v1186, 4294901760
    %1575 = vmatpush1.msra.mxu0 %v1574
    %1576 = vmatprep.subr.mxu0 0.0
    %v1577 = vand.u32 %v1187, 4294901760
    %1578 = vmatpush1.msra.mxu0 %v1577
    %1579 = vmatprep.subr.mxu0 0.0
    %v1580 = vand.u32 %v1188, 4294901760
    %1581 = vmatpush1.msra.mxu0 %v1580
    %1582 = vmatprep.subr.mxu0 0.0
    %v1583 = vand.u32 %v1189, 4294901760
    %1584 = vmatpush1.msra.mxu0 %v1583
    %1585 = vmatprep.subr.mxu0 0.0
    %v1586 = vand.u32 %v1190, 4294901760
    %1587 = vmatpush1.msra.mxu0 %v1586
    %1588 = vmatprep.subr.mxu0 0.0
    %v1589 = vand.u32 %v1191, 4294901760
    %1590 = vmatpush1.msra.mxu0 %v1589
    %1591 = vmatprep.subr.mxu0 0.0
    %v1592 = vand.u32 %v1192, 4294901760
    %1593 = vmatpush1.msra.mxu0 %v1592
    %1594 = vmatprep.subr.mxu0 0.0
    %1595 = vmatpush1.msra.mxu0 0.0
    %1596 = vmatprep.subr.mxu0 0.0
    %1597 = vmatpush1.msra.mxu0 0.0
    %1598 = vmatprep.subr.mxu0 0.0
    %1599 = vmatpush1.msra.mxu0 0.0
    %1600 = vmatprep.subr.mxu0 0.0
    %1601 = vmatpush1.msra.mxu0 0.0
    %1602 = vmatprep.subr.mxu0 0.0
    %1603 = vmatpush1.msra.mxu0 0.0
    %1604 = vmatprep.subr.mxu0 0.0
    %1605 = vmatpush1.msra.mxu0 0.0
    %1606 = vmatprep.subr.mxu0 0.0
    %1607 = vmatpush1.msra.mxu0 0.0
    %1608 = vmatprep.subr.mxu0 0.0
    %1609 = vmatpush1.msra.mxu0 0.0
    %1610 = vmatprep.subr.mxu0 0.0
    %1611 = vmatpush1.msra.mxu0 0.0
    %1612 = vmatprep.subr.mxu0 0.0
    %1613 = vmatpush1.msra.mxu0 0.0
    %1614 = vmatprep.subr.mxu0 0.0
    %1615 = vmatpush1.msra.mxu0 0.0
    %1616 = vmatprep.subr.mxu0 0.0
    %1617 = vmatpush1.msra.mxu0 0.0
    %1618 = vmatprep.subr.mxu0 0.0
    %1619 = vmatpush1.msra.mxu0 0.0
    %1620 = vmatprep.subr.mxu0 0.0
    %1621 = vmatpush1.msra.mxu0 0.0
    %1622 = vmatprep.subr.mxu0 0.0
    %1623 = vmatpush1.msra.mxu0 0.0
    %1624 = vmatprep.subr.mxu0 0.0
    %1625 = vmatpush1.msra.mxu0 0.0
    %1626 = vmatprep.mubr.f32.mxu0 0.0
    %v1627 = vand.u32 %v1176, 4294901760
    %v1628 = vsub.f32 %v1176, %v1627
    %v1629 = vand.u32 %v1628, 4294901760
    %1630 = vmatmul.mubr.f32.gmra.mrb[0].mxu0 %v1629
    %v1631 = vpop.f32.mrb[0].mxu0
    %v1632 = vadd.f32 %v1543, %v1631
    %v1633 = vpop.f32.mrb[0].mxu0
    %1634 = vdwg.mxu0
    %1635 = vmatprep.subr.mxu0 0.0
    %v1636 = vand.u32 %v1177, 4294901760
    %v1637 = vsub.f32 %v1177, %v1636
    %v1638 = vand.u32 %v1637, 4294901760
    %1639 = vmatpush1.msra.mxu0 %v1638
    %1640 = vmatprep.subr.mxu0 0.0
    %v1641 = vand.u32 %v1178, 4294901760
    %v1642 = vsub.f32 %v1178, %v1641
    %v1643 = vand.u32 %v1642, 4294901760
    %1644 = vmatpush1.msra.mxu0 %v1643
    %1645 = vmatprep.subr.mxu0 0.0
    %v1646 = vand.u32 %v1179, 4294901760
    %v1647 = vsub.f32 %v1179, %v1646
    %v1648 = vand.u32 %v1647, 4294901760
    %1649 = vmatpush1.msra.mxu0 %v1648
    %1650 = vmatprep.subr.mxu0 0.0
    %v1651 = vand.u32 %v1180, 4294901760
    %v1652 = vsub.f32 %v1180, %v1651
    %v1653 = vand.u32 %v1652, 4294901760
    %1654 = vmatpush1.msra.mxu0 %v1653
    %1655 = vmatprep.subr.mxu0 0.0
    %v1656 = vand.u32 %v1181, 4294901760
    %v1657 = vsub.f32 %v1181, %v1656
    %v1658 = vand.u32 %v1657, 4294901760
    %1659 = vmatpush1.msra.mxu0 %v1658
    %1660 = vmatprep.subr.mxu0 0.0
    %v1661 = vand.u32 %v1182, 4294901760
    %v1662 = vsub.f32 %v1182, %v1661
    %v1663 = vand.u32 %v1662, 4294901760
    %1664 = vmatpush1.msra.mxu0 %v1663
    %1665 = vmatprep.subr.mxu0 0.0
    %v1666 = vand.u32 %v1183, 4294901760
    %v1667 = vsub.f32 %v1183, %v1666
    %v1668 = vand.u32 %v1667, 4294901760
    %1669 = vmatpush1.msra.mxu0 %v1668
    %1670 = vmatprep.subr.mxu0 0.0
    %v1671 = vand.u32 %v1184, 4294901760
    %v1672 = vsub.f32 %v1184, %v1671
    %v1673 = vand.u32 %v1672, 4294901760
    %1674 = vmatpush1.msra.mxu0 %v1673
    %1675 = vmatprep.subr.mxu0 0.0
    %v1676 = vand.u32 %v1185, 4294901760
    %v1677 = vsub.f32 %v1185, %v1676
    %v1678 = vand.u32 %v1677, 4294901760
    %1679 = vmatpush1.msra.mxu0 %v1678
    %1680 = vmatprep.subr.mxu0 0.0
    %v1681 = vand.u32 %v1186, 4294901760
    %v1682 = vsub.f32 %v1186, %v1681
    %v1683 = vand.u32 %v1682, 4294901760
    %1684 = vmatpush1.msra.mxu0 %v1683
    %1685 = vmatprep.subr.mxu0 0.0
    %v1686 = vand.u32 %v1187, 4294901760
    %v1687 = vsub.f32 %v1187, %v1686
    %v1688 = vand.u32 %v1687, 4294901760
    %1689 = vmatpush1.msra.mxu0 %v1688
    %1690 = vmatprep.subr.mxu0 0.0
    %v1691 = vand.u32 %v1188, 4294901760
    %v1692 = vsub.f32 %v1188, %v1691
    %v1693 = vand.u32 %v1692, 4294901760
    %1694 = vmatpush1.msra.mxu0 %v1693
    %1695 = vmatprep.subr.mxu0 0.0
    %v1696 = vand.u32 %v1189, 4294901760
    %v1697 = vsub.f32 %v1189, %v1696
    %v1698 = vand.u32 %v1697, 4294901760
    %1699 = vmatpush1.msra.mxu0 %v1698
    %1700 = vmatprep.subr.mxu0 0.0
    %v1701 = vand.u32 %v1190, 4294901760
    %v1702 = vsub.f32 %v1190, %v1701
    %v1703 = vand.u32 %v1702, 4294901760
    %1704 = vmatpush1.msra.mxu0 %v1703
    %1705 = vmatprep.subr.mxu0 0.0
    %v1706 = vand.u32 %v1191, 4294901760
    %v1707 = vsub.f32 %v1191, %v1706
    %v1708 = vand.u32 %v1707, 4294901760
    %1709 = vmatpush1.msra.mxu0 %v1708
    %1710 = vmatprep.subr.mxu0 0.0
    %v1711 = vand.u32 %v1192, 4294901760
    %v1712 = vsub.f32 %v1192, %v1711
    %v1713 = vand.u32 %v1712, 4294901760
    %1714 = vmatpush1.msra.mxu0 %v1713
    %1715 = vmatprep.subr.mxu0 0.0
    %1716 = vmatpush1.msra.mxu0 0.0
    %1717 = vmatprep.subr.mxu0 0.0
    %1718 = vmatpush1.msra.mxu0 0.0
    %1719 = vmatprep.subr.mxu0 0.0
    %1720 = vmatpush1.msra.mxu0 0.0
    %1721 = vmatprep.subr.mxu0 0.0
    %1722 = vmatpush1.msra.mxu0 0.0
    %1723 = vmatprep.subr.mxu0 0.0
    %1724 = vmatpush1.msra.mxu0 0.0
    %1725 = vmatprep.subr.mxu0 0.0
    %1726 = vmatpush1.msra.mxu0 0.0
    %1727 = vmatprep.subr.mxu0 0.0
    %1728 = vmatpush1.msra.mxu0 0.0
    %1729 = vmatprep.subr.mxu0 0.0
    %1730 = vmatpush1.msra.mxu0 0.0
    %1731 = vmatprep.subr.mxu0 0.0
    %1732 = vmatpush1.msra.mxu0 0.0
    %1733 = vmatprep.subr.mxu0 0.0
    %1734 = vmatpush1.msra.mxu0 0.0
    %1735 = vmatprep.subr.mxu0 0.0
    %1736 = vmatpush1.msra.mxu0 0.0
    %1737 = vmatprep.subr.mxu0 0.0
    %1738 = vmatpush1.msra.mxu0 0.0
    %1739 = vmatprep.subr.mxu0 0.0
    %1740 = vmatpush1.msra.mxu0 0.0
    %1741 = vmatprep.subr.mxu0 0.0
    %1742 = vmatpush1.msra.mxu0 0.0
    %1743 = vmatprep.subr.mxu0 0.0
    %1744 = vmatpush1.msra.mxu0 0.0
    %1745 = vmatprep.subr.mxu0 0.0
    %1746 = vmatpush1.msra.mxu0 0.0
    %1747 = vmatprep.mubr.f32.mxu0 0.0
    %v1748 = vand.u32 %v1176, 4294901760
    %1749 = vmatmul.mubr.f32.gmra.mrb[0].mxu0 %v1748
    %v1750 = vpop.f32.mrb[0].mxu0
    %v1751 = vadd.f32 %v1632, %v1750
    %v1752 = vpop.f32.mrb[0].mxu0
    %1753 = vdwg.mxu0
    %1754 = vmatprep.subr.mxu0 0.0
    %v1755 = vand.u32 %v1177, 4294901760
    %1756 = vmatpush1.msra.mxu0 %v1755
    %1757 = vmatprep.subr.mxu0 0.0
    %v1758 = vand.u32 %v1178, 4294901760
    %1759 = vmatpush1.msra.mxu0 %v1758
    %1760 = vmatprep.subr.mxu0 0.0
    %v1761 = vand.u32 %v1179, 4294901760
    %1762 = vmatpush1.msra.mxu0 %v1761
    %1763 = vmatprep.subr.mxu0 0.0
    %v1764 = vand.u32 %v1180, 4294901760
    %1765 = vmatpush1.msra.mxu0 %v1764
    %1766 = vmatprep.subr.mxu0 0.0
    %v1767 = vand.u32 %v1181, 4294901760
    %1768 = vmatpush1.msra.mxu0 %v1767
    %1769 = vmatprep.subr.mxu0 0.0
    %v1770 = vand.u32 %v1182, 4294901760
    %1771 = vmatpush1.msra.mxu0 %v1770
    %1772 = vmatprep.subr.mxu0 0.0
    %v1773 = vand.u32 %v1183, 4294901760
    %1774 = vmatpush1.msra.mxu0 %v1773
    %1775 = vmatprep.subr.mxu0 0.0
    %v1776 = vand.u32 %v1184, 4294901760
    %1777 = vmatpush1.msra.mxu0 %v1776
    %1778 = vmatprep.subr.mxu0 0.0
    %v1779 = vand.u32 %v1185, 4294901760
    %1780 = vmatpush1.msra.mxu0 %v1779
    %1781 = vmatprep.subr.mxu0 0.0
    %v1782 = vand.u32 %v1186, 4294901760
    %1783 = vmatpush1.msra.mxu0 %v1782
    %1784 = vmatprep.subr.mxu0 0.0
    %v1785 = vand.u32 %v1187, 4294901760
    %1786 = vmatpush1.msra.mxu0 %v1785
    %1787 = vmatprep.subr.mxu0 0.0
    %v1788 = vand.u32 %v1188, 4294901760
    %1789 = vmatpush1.msra.mxu0 %v1788
    %1790 = vmatprep.subr.mxu0 0.0
    %v1791 = vand.u32 %v1189, 4294901760
    %1792 = vmatpush1.msra.mxu0 %v1791
    %1793 = vmatprep.subr.mxu0 0.0
    %v1794 = vand.u32 %v1190, 4294901760
    %1795 = vmatpush1.msra.mxu0 %v1794
    %1796 = vmatprep.subr.mxu0 0.0
    %v1797 = vand.u32 %v1191, 4294901760
    %1798 = vmatpush1.msra.mxu0 %v1797
    %1799 = vmatprep.subr.mxu0 0.0
    %v1800 = vand.u32 %v1192, 4294901760
    %1801 = vmatpush1.msra.mxu0 %v1800
    %1802 = vmatprep.subr.mxu0 0.0
    %1803 = vmatpush1.msra.mxu0 0.0
    %1804 = vmatprep.subr.mxu0 0.0
    %1805 = vmatpush1.msra.mxu0 0.0
    %1806 = vmatprep.subr.mxu0 0.0
    %1807 = vmatpush1.msra.mxu0 0.0
    %1808 = vmatprep.subr.mxu0 0.0
    %1809 = vmatpush1.msra.mxu0 0.0
    %1810 = vmatprep.subr.mxu0 0.0
    %1811 = vmatpush1.msra.mxu0 0.0
    %1812 = vmatprep.subr.mxu0 0.0
    %1813 = vmatpush1.msra.mxu0 0.0
    %1814 = vmatprep.subr.mxu0 0.0
    %1815 = vmatpush1.msra.mxu0 0.0
    %1816 = vmatprep.subr.mxu0 0.0
    %1817 = vmatpush1.msra.mxu0 0.0
    %1818 = vmatprep.subr.mxu0 0.0
    %1819 = vmatpush1.msra.mxu0 0.0
    %1820 = vmatprep.subr.mxu0 0.0
    %1821 = vmatpush1.msra.mxu0 0.0
    %1822 = vmatprep.subr.mxu0 0.0
    %1823 = vmatpush1.msra.mxu0 0.0
    %1824 = vmatprep.subr.mxu0 0.0
    %1825 = vmatpush1.msra.mxu0 0.0
    %1826 = vmatprep.subr.mxu0 0.0
    %1827 = vmatpush1.msra.mxu0 0.0
    %1828 = vmatprep.subr.mxu0 0.0
    %1829 = vmatpush1.msra.mxu0 0.0
    %1830 = vmatprep.subr.mxu0 0.0
    %1831 = vmatpush1.msra.mxu0 0.0
    %1832 = vmatprep.subr.mxu0 0.0
    %1833 = vmatpush1.msra.mxu0 0.0
    %1834 = vmatprep.mubr.f32.mxu0 0.0
    %v1835 = vand.u32 %v1176, 4294901760
    %1836 = vmatmul.mubr.f32.gmra.mrb[0].mxu0 %v1835
    %v1837 = vpop.f32.mrb[0].mxu0
    %v1838 = vadd.f32 %v1751, %v1837
    %v1839 = vpop.f32.mrb[0].mxu0
    %1840 = vdwg.mxu0
    %vm1841 = vcmask 31744
    %1842 = vst.msk [vmem:[%s7] sm:$0xff] %vm1841, %v1838
    // Predicated region
    $region34: #{qnetwork_forward.1} parent=1 // pred_check
      _
    $region35: #{qnetwork_forward.1} parent=1 // pred_check_branch
      %1844 = sbr.rel (0) target = $region37
    $region36: #{qnetwork_forward.1} parent=1 // pred_region
      _
    $region37: #{qnetwork_forward.1} parent=1 // pred_fallthru
      _
    // Predicated region
    $region38: #{qnetwork_forward.1} parent=1 // pred_check
      _
    $region39: #{qnetwork_forward.1} parent=1 // pred_check_branch
      %1846 = sbr.rel (0) target = $region41
    $region40: #{qnetwork_forward.1} parent=1 // pred_region
      _
    $region41: #{qnetwork_forward.1} parent=1 // pred_fallthru
      _
    %1847 = vsyncpa [#allocation3], 1

</llo_original>
